<compile_context>
chip_gen: v5e
topology: v5e:2x2
jax: 0.10.0
libtpu: 0.0.40
codegen_flags: <defaults>
</compile_context>

<pallas_src>
import jax
import jax.numpy as jnp
from jax.experimental import pallas as pl
from jax.experimental.pallas import tpu as pltpu

LATENT_SIZE = 30
D_IN = LATENT_SIZE + 2      # 32
HID = 64
LN_EPS = 1e-5
N_VEC = 14                  # packed vector columns (see pack_params)


def _round_up(a, b):
    return -(-a // b) * b


# ----------------------------- Pallas kernel ------------------------------ #
def decoder_kernel(x_ref, wx_ref, w1_ref, w2_ref, w3h_ref, v_ref, out_ref):
    # x_ref  : (32, TM)  bf16  features on sublanes, points on lanes
    # wx_ref : (128, 32) bf16  rows 0..63 = lin0, rows 64..127 = lin3 x-branch
    # w1_ref : (64, 64)  bf16    w2_ref : (32, 64) bf16    w3h_ref : (64, 32) bf16
    # v_ref  : (64, 14)  f32   packed bias / LayerNorm columns (+ final w4, b4)
    # out_ref: (1, TM)   f32
    x_in = x_ref[...]                       # (32, TM) bf16
    v = v_ref[...]                          # tiny, load once (f32)

    def col(i, rows=HID):
        return v[:rows, i:i + 1]            # (rows, 1) f32, broadcasts over lanes

    def dotf(w, h):
        return jnp.dot(w, h, preferred_element_type=jnp.float32)

    def ln_relu(z, g, be):
        # LayerNorm over the feature (sublane) axis, then ReLU; all f32.
        # var = E[z^2] - mean^2 so the two sublane reductions are independent.
        mu = jnp.mean(z, axis=0, keepdims=True)
        ms = jnp.mean(z * z, axis=0, keepdims=True)
        inv = jax.lax.rsqrt(ms - mu * mu + LN_EPS)
        return jnp.maximum((z - mu) * inv * g + be, 0.0)

    bf16 = jnp.bfloat16

    # x_in passes through the MXU exactly once: rows 0..63 are lin0's
    # pre-activation, rows 64..127 are lin3's x-branch (kept f32 to layer 3).
    zx = dotf(wx_ref[...], x_in)                              # (128, TM) f32
    z3x = zx[HID:]                                            # (64, TM)  f32

    # layer 0: lin0 (32->64), LayerNorm, ReLU
    h = ln_relu(zx[:HID] + col(0), col(1), col(2)).astype(bf16)
    # layer 1: lin1 (64->64), LayerNorm, ReLU
    h = ln_relu(dotf(w1_ref[...], h) + col(3), col(4), col(5)).astype(bf16)
    # layer 2: lin2 (64->32), LayerNorm, ReLU
    h = ln_relu(dotf(w2_ref[...], h) + col(6, D_IN), col(7, D_IN),
                col(8, D_IN)).astype(bf16)
    # layer 3: latent_in -> concat([h, input]) folded into w3h @ h + x-branch
    z = dotf(w3h_ref[...], h) + z3x + col(9)
    h = ln_relu(z, col(10), col(11))                          # stays f32
    # layer 4: lin4 (64->1) as VPU multiply + sublane reduce (MXU stays free)
    y = jnp.sum(h * col(12), axis=0, keepdims=True) + v[0:1, 13:14]
    # final tanh (self.th)
    out_ref[...] = jnp.tanh(y).astype(out_ref.dtype)


# --------------------------- parameter packing ----------------------------- #
def pack_params(params):
    """Pack params into bf16 MXU weights (true shapes) + one f32 vector blob.

    `params` holds nn.Linear-style weights as (in, out) and biases / LN params
    as (1, dim) -- see init_params().
    """
    f32, bf16 = jnp.float32, jnp.bfloat16
    wt = lambda k: params[k].astype(f32).T                # (out, in)
    w3 = wt("w3")                                         # lin3 over [h, x_in]: (64, 64)
    # Stack lin0 with the x_in-branch of lin3: x is pushed through the MXU once.
    wx = jnp.concatenate([wt("w0"), w3[:, D_IN:]], axis=0).astype(bf16)   # (128, 32)
    w1 = wt("w1").astype(bf16)                            # (64, 64)
    w2 = wt("w2").astype(bf16)                            # (32, 64)
    w3h = w3[:, :D_IN].astype(bf16)                       # (64, 32)

    cols = [params["b0"], params["g0"], params["be0"],
            params["b1"], params["g1"], params["be1"],
            params["b2"], params["g2"], params["be2"],
            params["b3"], params["g3"], params["be3"],
            params["w4"],                                 # (64,1) final weights
            params["b4"]]                                 # (1,1)  final bias
    v_pack = jnp.zeros((HID, N_VEC), f32)
    for i, c in enumerate(cols):
        vv = jnp.ravel(c).astype(f32)
        v_pack = v_pack.at[:vv.shape[0], i].set(vv)
    return wx, w1, w2, w3h, v_pack


# ------------------------------- wrapper ----------------------------------- #
def decoder_forward(x, wx, w1, w2, w3h, v_pack, *, tile_m=8192):
    """x: (N, 32) f32 -> (N, 1) f32 (DeepSDF decoder forward, inference).

    For minimum HBM traffic a caller can also hand the points over already
    feature-major / bf16 (shape (32, N)); here we transpose+cast in one pass.
    """
    N, F = x.shape
    assert F == D_IN

    # Point tile: large (amortizes the ~0.35us per-grid-step overhead), lane
    # aligned, >=2 steps when N allows, and preferably an even step count so
    # v7x's two TensorCores get a balanced share of the "parallel" axis.
    tm = max(128, min(_round_up(tile_m, 128), _round_up(pl.cdiv(N, 2), 128)))
    grid_m = pl.cdiv(N, tm)
    if grid_m > 2 and grid_m % 2:
        tm = max(128, _round_up(pl.cdiv(N, grid_m + 1), 128))
        grid_m = pl.cdiv(N, tm)

    # bf16 cast fused into the transpose (half the bytes moved); no padding --
    # the partial last block reads unspecified lanes (independent points, never
    # contaminate valid lanes) and its output writeback is masked.
    x_t = x.astype(jnp.bfloat16).T                        # (32, N): points on lanes

    out = pl.pallas_call(
        decoder_kernel,
        out_shape=jax.ShapeDtypeStruct((1, N), jnp.float32),
        grid_spec=pltpu.PrefetchScalarGridSpec(
            num_scalar_prefetch=0,
            grid=(grid_m,),
            in_specs=[
                pl.BlockSpec((D_IN, tm), lambda i: (0, i)),
                pl.BlockSpec((2 * HID, D_IN), lambda i: (0, 0)),
                pl.BlockSpec((HID, HID), lambda i: (0, 0)),
                pl.BlockSpec((D_IN, HID), lambda i: (0, 0)),
                pl.BlockSpec((HID, D_IN), lambda i: (0, 0)),
                pl.BlockSpec((HID, N_VEC), lambda i: (0, 0)),
            ],
            out_specs=pl.BlockSpec((1, tm), lambda i: (0, i)),
        ),
        compiler_params=pltpu.CompilerParams(
            dimension_semantics=("parallel",),
            # (64, tm) f32 intermediates peak well under this at tm=8192; 48 MiB
            # fits v7x's 64 MiB physical VMEM and is far above v5e's 16 MiB
            # scoped default.
            vmem_limit_bytes=48 * 1024 * 1024,
        ),
    )(x_t, wx, w1, w2, w3h, v_pack)

    return out.T                                          # (N, 1)


# --------------------------- pure-JAX reference ---------------------------- #
def decoder_ref(x, params):
    def linear(v, w, b):
        return v @ w + b

    def ln(v, g, be):
        mu = jnp.mean(v, axis=-1, keepdims=True)
        var = jnp.mean((v - mu) ** 2, axis=-1, keepdims=True)
        return (v - mu) / jnp.sqrt(var + LN_EPS) * g + be

    relu = lambda v: jnp.maximum(v, 0.0)

    h = relu(ln(linear(x, params["w0"], params["b0"]), params["g0"], params["be0"]))
    h = relu(ln(linear(h, params["w1"], params["b1"]), params["g1"], params["be1"]))
    h = relu(ln(linear(h, params["w2"], params["b2"]), params["g2"], params["be2"]))
    h = jnp.concatenate([h, x], axis=-1)
    h = relu(ln(linear(h, params["w3"], params["b3"]), params["g3"], params["be3"]))
    h = linear(h, params["w4"], params["b4"])
    return jnp.tanh(h)


# ------------------------------ param init --------------------------------- #
def init_params(key):
    # Deterministic synthetic init (shapes match the nn.Linear / LayerNorm
    # modules that Decoder.__init__ would create for this config).
    layer_dims = [(D_IN, HID), (HID, HID), (HID, D_IN), (HID, HID), (HID, 1)]
    params = {}
    keys = jax.random.split(key, 2 * len(layer_dims))
    for li, (din, dout) in enumerate(layer_dims):
        kw, kb = keys[2 * li], keys[2 * li + 1]
        bound = 1.0 / jnp.sqrt(din)
        params[f"w{li}"] = jax.random.uniform(kw, (din, dout), jnp.float32,
                                              -bound, bound)
        params[f"b{li}"] = jax.random.uniform(kb, (1, dout), jnp.float32,
                                              -bound, bound)
        if li < 4:  # norm_layers = (0,1,2,3): LayerNorm(out_dim)
            params[f"g{li}"] = jnp.ones((1, dout), jnp.float32)
            params[f"be{li}"] = jnp.zeros((1, dout), jnp.float32)
    return params
    # TODO(synk): dropout / latent_dropout / weight_norm / xyz_in_all branches
    # are disabled in this config (inference), so they are not translated.


if __name__ == "__main__":
    key = jax.random.PRNGKey(0)
    kx, kp = jax.random.split(key)

    N = 300                   # not a multiple of 128: exercises the masked
                              # partial-block path (no pad / slice in wrapper)
    x = jax.random.normal(kx, (N, D_IN), jnp.float32)
    params = init_params(kp)
    wx, w1, w2, w3h, v_pack = pack_params(params)

    out = decoder_forward(x, wx, w1, w2, w3h, v_pack, tile_m=8192)
    out = jax.block_until_ready(out)

    ref = decoder_ref(x, params)
    assert out.shape == (N, 1)
    max_err = float(jnp.max(jnp.abs(out - ref)))
    # bf16 MXU path vs f32 reference: loosened tolerance (per review).
    assert max_err < 3e-2, max_err

    print("KERNEL_OK")
</pallas_src>

<mosaic_0001>
module attributes {stable_mosaic.version = 11 : i64} {
  func.func @decoder_kernel(%arg0: i32, %arg1: memref<32x256xbf16, #tpu.memory_space<vmem>>, %arg2: memref<128x32xbf16, #tpu.memory_space<vmem>>, %arg3: memref<64x64xbf16, #tpu.memory_space<vmem>>, %arg4: memref<32x64xbf16, #tpu.memory_space<vmem>>, %arg5: memref<64x32xbf16, #tpu.memory_space<vmem>>, %arg6: memref<64x14xf32, #tpu.memory_space<vmem>>, %arg7: memref<1x256xf32, #tpu.memory_space<vmem>>) attributes {dimension_semantics = [#tpu.dimension_semantics<parallel>], iteration_bounds = array<i64: 2>, scalar_prefetch = 0 : i64, scratch_operands = 0 : i64, tpu.core_type = #tpu.core_type<tc>, window_params = [{transform_indices = @transform_0, window_bounds = array<i64: 32, 256>}, {pipeline_mode = #tpu.pipeline_mode<synchronous>, transform_indices = @transform_1, window_bounds = array<i64: 128, 32>}, {pipeline_mode = #tpu.pipeline_mode<synchronous>, transform_indices = @transform_2, window_bounds = array<i64: 64, 64>}, {pipeline_mode = #tpu.pipeline_mode<synchronous>, transform_indices = @transform_3, window_bounds = array<i64: 32, 64>}, {pipeline_mode = #tpu.pipeline_mode<synchronous>, transform_indices = @transform_4, window_bounds = array<i64: 64, 32>}, {pipeline_mode = #tpu.pipeline_mode<synchronous>, transform_indices = @transform_5, window_bounds = array<i64: 64, 14>}, {transform_indices = @transform_6, window_bounds = array<i64: 1, 256>}]} {
    %c0 = arith.constant 0 : index
    %c0_0 = arith.constant 0 : index
    %0 = vector.load %arg1[%c0, %c0_0] : memref<32x256xbf16, #tpu.memory_space<vmem>>, vector<32x256xbf16>
    %c0_1 = arith.constant 0 : index
    %c0_2 = arith.constant 0 : index
    %1 = vector.load %arg6[%c0_1, %c0_2] : memref<64x14xf32, #tpu.memory_space<vmem>>, vector<64x14xf32>
    %c0_3 = arith.constant 0 : index
    %c0_4 = arith.constant 0 : index
    %2 = vector.load %arg2[%c0_3, %c0_4] : memref<128x32xbf16, #tpu.memory_space<vmem>>, vector<128x32xbf16>
    %cst = arith.constant dense<0.000000e+00> : vector<128x256xf32>
    %3 = tpu.matmul %2, %0, %cst {dimension_numbers = #tpu.dot_dimension_numbers<[1], [0], [0], [1], [0, 0, 1, 1], [], []>} : vector<128x32xbf16>, vector<32x256xbf16>, vector<128x256xf32> -> vector<128x256xf32>
    %4 = vector.extract_strided_slice %3 {offsets = [64, 0], sizes = [64, 256], strides = [1, 1]} : vector<128x256xf32> to vector<64x256xf32>
    %5 = vector.extract_strided_slice %3 {offsets = [0, 0], sizes = [64, 256], strides = [1, 1]} : vector<128x256xf32> to vector<64x256xf32>
    %6 = vector.extract_strided_slice %1 {offsets = [0, 0], sizes = [64, 1], strides = [1, 1]} : vector<64x14xf32> to vector<64x1xf32>
    %7 = vector.broadcast %6 : vector<64x1xf32> to vector<64x256xf32>
    %8 = arith.addf %5, %7 : vector<64x256xf32>
    %9 = vector.extract_strided_slice %1 {offsets = [0, 1], sizes = [64, 1], strides = [1, 1]} : vector<64x14xf32> to vector<64x1xf32>
    %10 = vector.extract_strided_slice %1 {offsets = [0, 2], sizes = [64, 1], strides = [1, 1]} : vector<64x14xf32> to vector<64x1xf32>
    %cst_5 = arith.constant dense<0.000000e+00> : vector<256xf32>
    %11 = vector.multi_reduction <add>, %8, %cst_5 [0] : vector<64x256xf32> to vector<256xf32>
    %12 = vector.shape_cast %11 : vector<256xf32> to vector<1x256xf32>
    %cst_6 = arith.constant 6.400000e+01 : f32
    %13 = vector.broadcast %cst_6 : f32 to vector<1x256xf32>
    %14 = arith.divf %12, %13 : vector<1x256xf32>
    %15 = arith.mulf %8, %8 : vector<64x256xf32>
    %cst_7 = arith.constant dense<0.000000e+00> : vector<256xf32>
    %16 = vector.multi_reduction <add>, %15, %cst_7 [0] : vector<64x256xf32> to vector<256xf32>
    %17 = vector.shape_cast %16 : vector<256xf32> to vector<1x256xf32>
    %cst_8 = arith.constant 6.400000e+01 : f32
    %18 = vector.broadcast %cst_8 : f32 to vector<1x256xf32>
    %19 = arith.divf %17, %18 : vector<1x256xf32>
    %20 = arith.mulf %14, %14 : vector<1x256xf32>
    %21 = arith.subf %19, %20 : vector<1x256xf32>
    %cst_9 = arith.constant 9.99999974E-6 : f32
    %22 = vector.broadcast %cst_9 : f32 to vector<1x256xf32>
    %23 = arith.addf %21, %22 : vector<1x256xf32>
    %24 = math.rsqrt %23 : vector<1x256xf32>
    %25 = vector.broadcast %14 : vector<1x256xf32> to vector<64x256xf32>
    %26 = arith.subf %8, %25 : vector<64x256xf32>
    %27 = vector.broadcast %24 : vector<1x256xf32> to vector<64x256xf32>
    %28 = arith.mulf %26, %27 : vector<64x256xf32>
    %29 = vector.broadcast %9 : vector<64x1xf32> to vector<64x256xf32>
    %30 = arith.mulf %28, %29 : vector<64x256xf32>
    %31 = vector.broadcast %10 : vector<64x1xf32> to vector<64x256xf32>
    %32 = arith.addf %30, %31 : vector<64x256xf32>
    %cst_10 = arith.constant 0.000000e+00 : f32
    %33 = vector.broadcast %cst_10 : f32 to vector<64x256xf32>
    %34 = arith.maximumf %32, %33 : vector<64x256xf32>
    %35 = arith.truncf %34 : vector<64x256xf32> to vector<64x256xbf16>
    %c0_11 = arith.constant 0 : index
    %c0_12 = arith.constant 0 : index
    %36 = vector.load %arg3[%c0_11, %c0_12] : memref<64x64xbf16, #tpu.memory_space<vmem>>, vector<64x64xbf16>
    %cst_13 = arith.constant dense<0.000000e+00> : vector<64x256xf32>
    %37 = tpu.matmul %36, %35, %cst_13 {dimension_numbers = #tpu.dot_dimension_numbers<[1], [0], [0], [1], [0, 0, 1, 1], [], []>} : vector<64x64xbf16>, vector<64x256xbf16>, vector<64x256xf32> -> vector<64x256xf32>
    %38 = vector.extract_strided_slice %1 {offsets = [0, 3], sizes = [64, 1], strides = [1, 1]} : vector<64x14xf32> to vector<64x1xf32>
    %39 = vector.broadcast %38 : vector<64x1xf32> to vector<64x256xf32>
    %40 = arith.addf %37, %39 : vector<64x256xf32>
    %41 = vector.extract_strided_slice %1 {offsets = [0, 4], sizes = [64, 1], strides = [1, 1]} : vector<64x14xf32> to vector<64x1xf32>
    %42 = vector.extract_strided_slice %1 {offsets = [0, 5], sizes = [64, 1], strides = [1, 1]} : vector<64x14xf32> to vector<64x1xf32>
    %cst_14 = arith.constant dense<0.000000e+00> : vector<256xf32>
    %43 = vector.multi_reduction <add>, %40, %cst_14 [0] : vector<64x256xf32> to vector<256xf32>
    %44 = vector.shape_cast %43 : vector<256xf32> to vector<1x256xf32>
    %cst_15 = arith.constant 6.400000e+01 : f32
    %45 = vector.broadcast %cst_15 : f32 to vector<1x256xf32>
    %46 = arith.divf %44, %45 : vector<1x256xf32>
    %47 = arith.mulf %40, %40 : vector<64x256xf32>
    %cst_16 = arith.constant dense<0.000000e+00> : vector<256xf32>
    %48 = vector.multi_reduction <add>, %47, %cst_16 [0] : vector<64x256xf32> to vector<256xf32>
    %49 = vector.shape_cast %48 : vector<256xf32> to vector<1x256xf32>
    %cst_17 = arith.constant 6.400000e+01 : f32
    %50 = vector.broadcast %cst_17 : f32 to vector<1x256xf32>
    %51 = arith.divf %49, %50 : vector<1x256xf32>
    %52 = arith.mulf %46, %46 : vector<1x256xf32>
    %53 = arith.subf %51, %52 : vector<1x256xf32>
    %cst_18 = arith.constant 9.99999974E-6 : f32
    %54 = vector.broadcast %cst_18 : f32 to vector<1x256xf32>
    %55 = arith.addf %53, %54 : vector<1x256xf32>
    %56 = math.rsqrt %55 : vector<1x256xf32>
    %57 = vector.broadcast %46 : vector<1x256xf32> to vector<64x256xf32>
    %58 = arith.subf %40, %57 : vector<64x256xf32>
    %59 = vector.broadcast %56 : vector<1x256xf32> to vector<64x256xf32>
    %60 = arith.mulf %58, %59 : vector<64x256xf32>
    %61 = vector.broadcast %41 : vector<64x1xf32> to vector<64x256xf32>
    %62 = arith.mulf %60, %61 : vector<64x256xf32>
    %63 = vector.broadcast %42 : vector<64x1xf32> to vector<64x256xf32>
    %64 = arith.addf %62, %63 : vector<64x256xf32>
    %cst_19 = arith.constant 0.000000e+00 : f32
    %65 = vector.broadcast %cst_19 : f32 to vector<64x256xf32>
    %66 = arith.maximumf %64, %65 : vector<64x256xf32>
    %67 = arith.truncf %66 : vector<64x256xf32> to vector<64x256xbf16>
    %c0_20 = arith.constant 0 : index
    %c0_21 = arith.constant 0 : index
    %68 = vector.load %arg4[%c0_20, %c0_21] : memref<32x64xbf16, #tpu.memory_space<vmem>>, vector<32x64xbf16>
    %cst_22 = arith.constant dense<0.000000e+00> : vector<32x256xf32>
    %69 = tpu.matmul %68, %67, %cst_22 {dimension_numbers = #tpu.dot_dimension_numbers<[1], [0], [0], [1], [0, 0, 1, 1], [], []>} : vector<32x64xbf16>, vector<64x256xbf16>, vector<32x256xf32> -> vector<32x256xf32>
    %70 = vector.extract_strided_slice %1 {offsets = [0, 6], sizes = [32, 1], strides = [1, 1]} : vector<64x14xf32> to vector<32x1xf32>
    %71 = vector.broadcast %70 : vector<32x1xf32> to vector<32x256xf32>
    %72 = arith.addf %69, %71 : vector<32x256xf32>
    %73 = vector.extract_strided_slice %1 {offsets = [0, 7], sizes = [32, 1], strides = [1, 1]} : vector<64x14xf32> to vector<32x1xf32>
    %74 = vector.extract_strided_slice %1 {offsets = [0, 8], sizes = [32, 1], strides = [1, 1]} : vector<64x14xf32> to vector<32x1xf32>
    %cst_23 = arith.constant dense<0.000000e+00> : vector<256xf32>
    %75 = vector.multi_reduction <add>, %72, %cst_23 [0] : vector<32x256xf32> to vector<256xf32>
    %76 = vector.shape_cast %75 : vector<256xf32> to vector<1x256xf32>
    %cst_24 = arith.constant 3.200000e+01 : f32
    %77 = vector.broadcast %cst_24 : f32 to vector<1x256xf32>
    %78 = arith.divf %76, %77 : vector<1x256xf32>
    %79 = arith.mulf %72, %72 : vector<32x256xf32>
    %cst_25 = arith.constant dense<0.000000e+00> : vector<256xf32>
    %80 = vector.multi_reduction <add>, %79, %cst_25 [0] : vector<32x256xf32> to vector<256xf32>
    %81 = vector.shape_cast %80 : vector<256xf32> to vector<1x256xf32>
    %cst_26 = arith.constant 3.200000e+01 : f32
    %82 = vector.broadcast %cst_26 : f32 to vector<1x256xf32>
    %83 = arith.divf %81, %82 : vector<1x256xf32>
    %84 = arith.mulf %78, %78 : vector<1x256xf32>
    %85 = arith.subf %83, %84 : vector<1x256xf32>
    %cst_27 = arith.constant 9.99999974E-6 : f32
    %86 = vector.broadcast %cst_27 : f32 to vector<1x256xf32>
    %87 = arith.addf %85, %86 : vector<1x256xf32>
    %88 = math.rsqrt %87 : vector<1x256xf32>
    %89 = vector.broadcast %78 : vector<1x256xf32> to vector<32x256xf32>
    %90 = arith.subf %72, %89 : vector<32x256xf32>
    %91 = vector.broadcast %88 : vector<1x256xf32> to vector<32x256xf32>
    %92 = arith.mulf %90, %91 : vector<32x256xf32>
    %93 = vector.broadcast %73 : vector<32x1xf32> to vector<32x256xf32>
    %94 = arith.mulf %92, %93 : vector<32x256xf32>
    %95 = vector.broadcast %74 : vector<32x1xf32> to vector<32x256xf32>
    %96 = arith.addf %94, %95 : vector<32x256xf32>
    %cst_28 = arith.constant 0.000000e+00 : f32
    %97 = vector.broadcast %cst_28 : f32 to vector<32x256xf32>
    %98 = arith.maximumf %96, %97 : vector<32x256xf32>
    %99 = arith.truncf %98 : vector<32x256xf32> to vector<32x256xbf16>
    %c0_29 = arith.constant 0 : index
    %c0_30 = arith.constant 0 : index
    %100 = vector.load %arg5[%c0_29, %c0_30] : memref<64x32xbf16, #tpu.memory_space<vmem>>, vector<64x32xbf16>
    %cst_31 = arith.constant dense<0.000000e+00> : vector<64x256xf32>
    %101 = tpu.matmul %100, %99, %cst_31 {dimension_numbers = #tpu.dot_dimension_numbers<[1], [0], [0], [1], [0, 0, 1, 1], [], []>} : vector<64x32xbf16>, vector<32x256xbf16>, vector<64x256xf32> -> vector<64x256xf32>
    %102 = arith.addf %101, %4 : vector<64x256xf32>
    %103 = vector.extract_strided_slice %1 {offsets = [0, 9], sizes = [64, 1], strides = [1, 1]} : vector<64x14xf32> to vector<64x1xf32>
    %104 = vector.broadcast %103 : vector<64x1xf32> to vector<64x256xf32>
    %105 = arith.addf %102, %104 : vector<64x256xf32>
    %106 = vector.extract_strided_slice %1 {offsets = [0, 10], sizes = [64, 1], strides = [1, 1]} : vector<64x14xf32> to vector<64x1xf32>
    %107 = vector.extract_strided_slice %1 {offsets = [0, 11], sizes = [64, 1], strides = [1, 1]} : vector<64x14xf32> to vector<64x1xf32>
    %cst_32 = arith.constant dense<0.000000e+00> : vector<256xf32>
    %108 = vector.multi_reduction <add>, %105, %cst_32 [0] : vector<64x256xf32> to vector<256xf32>
    %109 = vector.shape_cast %108 : vector<256xf32> to vector<1x256xf32>
    %cst_33 = arith.constant 6.400000e+01 : f32
    %110 = vector.broadcast %cst_33 : f32 to vector<1x256xf32>
    %111 = arith.divf %109, %110 : vector<1x256xf32>
    %112 = arith.mulf %105, %105 : vector<64x256xf32>
    %cst_34 = arith.constant dense<0.000000e+00> : vector<256xf32>
    %113 = vector.multi_reduction <add>, %112, %cst_34 [0] : vector<64x256xf32> to vector<256xf32>
    %114 = vector.shape_cast %113 : vector<256xf32> to vector<1x256xf32>
    %cst_35 = arith.constant 6.400000e+01 : f32
    %115 = vector.broadcast %cst_35 : f32 to vector<1x256xf32>
    %116 = arith.divf %114, %115 : vector<1x256xf32>
    %117 = arith.mulf %111, %111 : vector<1x256xf32>
    %118 = arith.subf %116, %117 : vector<1x256xf32>
    %cst_36 = arith.constant 9.99999974E-6 : f32
    %119 = vector.broadcast %cst_36 : f32 to vector<1x256xf32>
    %120 = arith.addf %118, %119 : vector<1x256xf32>
    %121 = math.rsqrt %120 : vector<1x256xf32>
    %122 = vector.broadcast %111 : vector<1x256xf32> to vector<64x256xf32>
    %123 = arith.subf %105, %122 : vector<64x256xf32>
    %124 = vector.broadcast %121 : vector<1x256xf32> to vector<64x256xf32>
    %125 = arith.mulf %123, %124 : vector<64x256xf32>
    %126 = vector.broadcast %106 : vector<64x1xf32> to vector<64x256xf32>
    %127 = arith.mulf %125, %126 : vector<64x256xf32>
    %128 = vector.broadcast %107 : vector<64x1xf32> to vector<64x256xf32>
    %129 = arith.addf %127, %128 : vector<64x256xf32>
    %cst_37 = arith.constant 0.000000e+00 : f32
    %130 = vector.broadcast %cst_37 : f32 to vector<64x256xf32>
    %131 = arith.maximumf %129, %130 : vector<64x256xf32>
    %132 = vector.extract_strided_slice %1 {offsets = [0, 12], sizes = [64, 1], strides = [1, 1]} : vector<64x14xf32> to vector<64x1xf32>
    %133 = vector.broadcast %132 : vector<64x1xf32> to vector<64x256xf32>
    %134 = arith.mulf %131, %133 : vector<64x256xf32>
    %cst_38 = arith.constant dense<0.000000e+00> : vector<256xf32>
    %135 = vector.multi_reduction <add>, %134, %cst_38 [0] : vector<64x256xf32> to vector<256xf32>
    %136 = vector.shape_cast %135 : vector<256xf32> to vector<1x256xf32>
    %137 = vector.extract_strided_slice %1 {offsets = [0, 13], sizes = [1, 1], strides = [1, 1]} : vector<64x14xf32> to vector<1x1xf32>
    %138 = vector.broadcast %137 : vector<1x1xf32> to vector<1x256xf32>
    %139 = arith.addf %136, %138 : vector<1x256xf32>
    %140 = math.tanh %139 : vector<1x256xf32>
    %c0_39 = arith.constant 0 : index
    %c0_40 = arith.constant 0 : index
    %141 = vector.load %arg7[%c0_39, %c0_40] : memref<1x256xf32, #tpu.memory_space<vmem>>, vector<1x256xf32>
    tpu.vector_store %arg7[%c0_39, %c0_40], %140 {strides = array<i32>} : memref<1x256xf32, #tpu.memory_space<vmem>>, vector<1x256xf32>,
    return
  }
  func.func @transform_0(%arg0: i32) -> (i32, i32) {
    %c0_i32 = arith.constant 0 : i32
    %c0_i32_0 = arith.constant 0 : i32
    return %c0_i32, %arg0 : i32, i32
  }
  func.func @transform_1(%arg0: i32) -> (i32, i32) {
    %c0_i32 = arith.constant 0 : i32
    %c0_i32_0 = arith.constant 0 : i32
    %c0_i32_1 = arith.constant 0 : i32
    return %c0_i32, %c0_i32_0 : i32, i32
  }
  func.func @transform_2(%arg0: i32) -> (i32, i32) {
    %c0_i32 = arith.constant 0 : i32
    %c0_i32_0 = arith.constant 0 : i32
    %c0_i32_1 = arith.constant 0 : i32
    return %c0_i32, %c0_i32_0 : i32, i32
  }
  func.func @transform_3(%arg0: i32) -> (i32, i32) {
    %c0_i32 = arith.constant 0 : i32
    %c0_i32_0 = arith.constant 0 : i32
    %c0_i32_1 = arith.constant 0 : i32
    return %c0_i32, %c0_i32_0 : i32, i32
  }
  func.func @transform_4(%arg0: i32) -> (i32, i32) {
    %c0_i32 = arith.constant 0 : i32
    %c0_i32_0 = arith.constant 0 : i32
    %c0_i32_1 = arith.constant 0 : i32
    return %c0_i32, %c0_i32_0 : i32, i32
  }
  func.func @transform_5(%arg0: i32) -> (i32, i32) {
    %c0_i32 = arith.constant 0 : i32
    %c0_i32_0 = arith.constant 0 : i32
    %c0_i32_1 = arith.constant 0 : i32
    return %c0_i32, %c0_i32_0 : i32, i32
  }
  func.func @transform_6(%arg0: i32) -> (i32, i32) {
    %c0_i32 = arith.constant 0 : i32
    %c0_i32_0 = arith.constant 0 : i32
    return %c0_i32, %arg0 : i32, i32
  }
}

</mosaic_0001>

<llo_original>
// kernel: tpu_custom_call.1
$region0: #{tpu_custom_call.1}
  #allocation0 [shape = 'u32[]', space=smem, size = 0x4, offset = 0x4, fixed_abs, tag = 'smem constant byte address 0x4 - core index']
  #allocation1 [shape = 'u32[72,128]{1,0:T(1,128)}', space=vmem, size = 0x9000, scoped, tag = 'internal scratch']
  %s0 = inlined_call_operand.vmem [shape: bf16[32,300], index: 0, kind: input, shape index: {}]
  %s1 = inlined_call_operand.vmem [shape: bf16[128,32], index: 1, kind: input, shape index: {}]
  %s2 = inlined_call_operand.vmem [shape: bf16[64,64], index: 2, kind: input, shape index: {}]
  %s3 = inlined_call_operand.vmem [shape: bf16[32,64], index: 3, kind: input, shape index: {}]
  %s4 = inlined_call_operand.vmem [shape: bf16[64,32], index: 4, kind: input, shape index: {}]
  %s5 = inlined_call_operand.vmem [shape: f32[64,14], index: 5, kind: input, shape index: {}]
  %s6 = inlined_call_operand.hbm [shape: f32[1,300], index: 6, kind: output, shape index: {}]
  %s7 = sld [smem:[#allocation0]]
  $region123: #{tpu_custom_call.1} parent=0
    _
  %s9 = ssub.s32 1, %s7
  %s10 = scalar_select 0, %s9, %s7
  $region1: #{tpu_custom_call.1} parent=0
    #allocation2 [shape = 'u8[32768]{0}', space=vmem, size = 0x8000, scoped, tag = 'input window, operand 0']
    #allocation3 [shape = 'u8[2048]{0}', space=vmem, size = 0x800, scoped, tag = 'output window, operand 0']
    #allocation4 [shape = 's32[2]{0}', space=sflag, size = 0x8, scoped, tag = 'scoped memory for tpu_custom_call.1']
    %11 = vsyncpa [#allocation4], 0
    %s12 = scalar_lea.sflag [#allocation4], 1
    %13 = vsyncpa %s12, 0
    loop: start=0, step=1, limit=4
    $region2: #{tpu_custom_call.1} parent=1 // loop_pre_header
      _
    $region3: #{tpu_custom_call.1} parent=1 // loop_header
      %s15 = sphi 0, %s19
      %p16 = scmp.ge.s32.totalorder %s15, 4
      %s25 = sphi 0, %s27
      %s28 = sphi 0, %s25
      %s29 = sphi 0, %s28
      %s45 = sphi 0, %s29
      %s49 = sphi 0, %s49
      %s51 = sphi 0, %s49
      %s52 = sphi 0, %s51
      %s66 = sphi 0, %s52
      %s70 = sphi 0, %s70
      %s72 = sphi 0, %s70
      %s73 = sphi 0, %s72
      %s87 = sphi 0, %s73
      %s91 = sphi 0, %s91
      %s93 = sphi 0, %s91
      %s94 = sphi 0, %s93
      %s108 = sphi 0, %s94
      %s112 = sphi 0, %s112
      %s114 = sphi 0, %s112
      %s115 = sphi 0, %s114
      %s129 = sphi 0, %s115
      %s133 = sphi 0, %s133
      %s135 = sphi 0, %s133
      %s136 = sphi 0, %s135
      %s150 = sphi 0, %s136
      %s156 = sphi 0, %s158
      %s159 = sphi 0, %s156
      %s160 = sphi 0, %s159
      %s176 = sphi 0, %s160
    $region4: #{tpu_custom_call.1} parent=1 // loop_header_branch
      %18 = sbr.rel (%p16) target = $region8
    $region5: #{tpu_custom_call.1} parent=1 // loop_body
      %s20 = ssub.s32 %s15, 1
      %s21 = ssub.s32 %s15, 2
      %s22 = sadd.s32 %s15, 1
      %s23 = ssub.s32 %s15, %s22
      %p24 = scmp.eq.s32.totalorder %s23, 0
      %s26 = sadd.s32 %s25, 1
      %s27 = scalar_select %p24, %s25, %s26
      %p30 = pneg %p24
      %p31 = scmp.eq.s32.totalorder %s15, 1
      %p32 = por %p30, %p31
      %p33 = scmp.ne.s32.totalorder %s25, %s28
      %p34 = scmp.eq.s32.totalorder %s15, 0
      %p35 = por %p33, %p34
      %p36 = scmp.ne.s32.totalorder %s25, %s28
      %p37 = scmp.eq.s32.totalorder %s20, 1
      %p38 = por %p36, %p37
      %p39 = scmp.ne.s32.totalorder %s28, %s29
      %p40 = scmp.eq.s32.totalorder %s20, 0
      %p41 = por %p39, %p40
      %p42 = scmp.ne.s32.totalorder %s28, %s29
      %p43 = scmp.eq.s32.totalorder %s21, 1
      %p44 = por %p42, %p43
      %p46 = scmp.ne.s32.totalorder %s29, %s45
      %p47 = scmp.eq.s32.totalorder %s21, 0
      %p48 = por %p46, %p47
      %s50 = sadd.s32 %s49, 1
      %p53 = scmp.eq.s32.totalorder %s15, 1
      %p54 = scmp.ne.s32.totalorder %s49, %s51
      %p55 = scmp.eq.s32.totalorder %s15, 0
      %p56 = por %p54, %p55
      %p57 = scmp.ne.s32.totalorder %s49, %s51
      %p58 = scmp.eq.s32.totalorder %s20, 1
      %p59 = por %p57, %p58
      %p60 = scmp.ne.s32.totalorder %s51, %s52
      %p61 = scmp.eq.s32.totalorder %s20, 0
      %p62 = por %p60, %p61
      %p63 = scmp.ne.s32.totalorder %s51, %s52
      %p64 = scmp.eq.s32.totalorder %s21, 1
      %p65 = por %p63, %p64
      %p67 = scmp.ne.s32.totalorder %s52, %s66
      %p68 = scmp.eq.s32.totalorder %s21, 0
      %p69 = por %p67, %p68
      %s71 = sadd.s32 %s70, 1
      %p74 = scmp.eq.s32.totalorder %s15, 1
      %p75 = scmp.ne.s32.totalorder %s70, %s72
      %p76 = scmp.eq.s32.totalorder %s15, 0
      %p77 = por %p75, %p76
      %p78 = scmp.ne.s32.totalorder %s70, %s72
      %p79 = scmp.eq.s32.totalorder %s20, 1
      %p80 = por %p78, %p79
      %p81 = scmp.ne.s32.totalorder %s72, %s73
      %p82 = scmp.eq.s32.totalorder %s20, 0
      %p83 = por %p81, %p82
      %p84 = scmp.ne.s32.totalorder %s72, %s73
      %p85 = scmp.eq.s32.totalorder %s21, 1
      %p86 = por %p84, %p85
      %p88 = scmp.ne.s32.totalorder %s73, %s87
      %p89 = scmp.eq.s32.totalorder %s21, 0
      %p90 = por %p88, %p89
      %s92 = sadd.s32 %s91, 1
      %p95 = scmp.eq.s32.totalorder %s15, 1
      %p96 = scmp.ne.s32.totalorder %s91, %s93
      %p97 = scmp.eq.s32.totalorder %s15, 0
      %p98 = por %p96, %p97
      %p99 = scmp.ne.s32.totalorder %s91, %s93
      %p100 = scmp.eq.s32.totalorder %s20, 1
      %p101 = por %p99, %p100
      %p102 = scmp.ne.s32.totalorder %s93, %s94
      %p103 = scmp.eq.s32.totalorder %s20, 0
      %p104 = por %p102, %p103
      %p105 = scmp.ne.s32.totalorder %s93, %s94
      %p106 = scmp.eq.s32.totalorder %s21, 1
      %p107 = por %p105, %p106
      %p109 = scmp.ne.s32.totalorder %s94, %s108
      %p110 = scmp.eq.s32.totalorder %s21, 0
      %p111 = por %p109, %p110
      %s113 = sadd.s32 %s112, 1
      %p116 = scmp.eq.s32.totalorder %s15, 1
      %p117 = scmp.ne.s32.totalorder %s112, %s114
      %p118 = scmp.eq.s32.totalorder %s15, 0
      %p119 = por %p117, %p118
      %p120 = scmp.ne.s32.totalorder %s112, %s114
      %p121 = scmp.eq.s32.totalorder %s20, 1
      %p122 = por %p120, %p121
      %p123 = scmp.ne.s32.totalorder %s114, %s115
      %p124 = scmp.eq.s32.totalorder %s20, 0
      %p125 = por %p123, %p124
      %p126 = scmp.ne.s32.totalorder %s114, %s115
      %p127 = scmp.eq.s32.totalorder %s21, 1
      %p128 = por %p126, %p127
      %p130 = scmp.ne.s32.totalorder %s115, %s129
      %p131 = scmp.eq.s32.totalorder %s21, 0
      %p132 = por %p130, %p131
      %s134 = sadd.s32 %s133, 1
      %p137 = scmp.eq.s32.totalorder %s15, 1
      %p138 = scmp.ne.s32.totalorder %s133, %s135
      %p139 = scmp.eq.s32.totalorder %s15, 0
      %p140 = por %p138, %p139
      %p141 = scmp.ne.s32.totalorder %s133, %s135
      %p142 = scmp.eq.s32.totalorder %s20, 1
      %p143 = por %p141, %p142
      %p144 = scmp.ne.s32.totalorder %s135, %s136
      %p145 = scmp.eq.s32.totalorder %s20, 0
      %p146 = por %p144, %p145
      %p147 = scmp.ne.s32.totalorder %s135, %s136
      %p148 = scmp.eq.s32.totalorder %s21, 1
      %p149 = por %p147, %p148
      %p151 = scmp.ne.s32.totalorder %s136, %s150
      %p152 = scmp.eq.s32.totalorder %s21, 0
      %p153 = por %p151, %p152
      %s154 = ssub.s32 %s15, %s22
      %p155 = scmp.eq.s32.totalorder %s154, 0
      %s157 = sadd.s32 %s156, 1
      %s158 = scalar_select %p155, %s156, %s157
      %p161 = pneg %p155
      %p162 = scmp.eq.s32.totalorder %s15, 1
      %p163 = por %p161, %p162
      %p164 = scmp.ne.s32.totalorder %s156, %s159
      %p165 = scmp.eq.s32.totalorder %s15, 0
      %p166 = por %p164, %p165
      %p167 = scmp.ne.s32.totalorder %s156, %s159
      %p168 = scmp.eq.s32.totalorder %s20, 1
      %p169 = por %p167, %p168
      %p170 = scmp.ne.s32.totalorder %s159, %s160
      %p171 = scmp.eq.s32.totalorder %s20, 0
      %p172 = por %p170, %p171
      %p173 = scmp.ne.s32.totalorder %s159, %s160
      %p174 = scmp.eq.s32.totalorder %s21, 1
      %p175 = por %p173, %p174
      %p177 = scmp.ne.s32.totalorder %s160, %s176
      %p178 = scmp.eq.s32.totalorder %s21, 0
      %p179 = por %p177, %p178
      %p180 = scmp.le.s32.totalorder 1, %s15
      %p181 = scmp.lt.s32.totalorder %s15, 3
      %p182 = pnand %p180, %p181
      %p183 = pneg %p182
      // Predicated region
      $region9: #{tpu_custom_call.1} parent=5 // pred_check
        _
      $region10: #{tpu_custom_call.1} parent=5 // pred_check_branch
        %185 = sbr.rel (%p182) target = $region12
      $region11: #{tpu_custom_call.1} parent=5 // pred_region
        %s186 = ssub.s32 %s15, 1
        // Predicated region
        $region13: #{tpu_custom_call.1} parent=11 // pred_check
          %p187 = pneg %p62
        $region14: #{tpu_custom_call.1} parent=11 // pred_check_branch
          %189 = sbr.rel (%p187) target = $region16
        $region15: #{tpu_custom_call.1} parent=11 // pred_region
          _
        $region16: #{tpu_custom_call.1} parent=11 // pred_fallthru
          _
        // Predicated region
        $region17: #{tpu_custom_call.1} parent=11 // pred_check
          %p190 = pneg %p83
        $region18: #{tpu_custom_call.1} parent=11 // pred_check_branch
          %192 = sbr.rel (%p190) target = $region20
        $region19: #{tpu_custom_call.1} parent=11 // pred_region
          _
        $region20: #{tpu_custom_call.1} parent=11 // pred_fallthru
          _
        // Predicated region
        $region21: #{tpu_custom_call.1} parent=11 // pred_check
          %p193 = pneg %p104
        $region22: #{tpu_custom_call.1} parent=11 // pred_check_branch
          %195 = sbr.rel (%p193) target = $region24
        $region23: #{tpu_custom_call.1} parent=11 // pred_region
          _
        $region24: #{tpu_custom_call.1} parent=11 // pred_fallthru
          _
        // Predicated region
        $region25: #{tpu_custom_call.1} parent=11 // pred_check
          %p196 = pneg %p125
        $region26: #{tpu_custom_call.1} parent=11 // pred_check_branch
          %198 = sbr.rel (%p196) target = $region28
        $region27: #{tpu_custom_call.1} parent=11 // pred_region
          _
        $region28: #{tpu_custom_call.1} parent=11 // pred_fallthru
          _
        // Predicated region
        $region29: #{tpu_custom_call.1} parent=11 // pred_check
          %p199 = pneg %p146
        $region30: #{tpu_custom_call.1} parent=11 // pred_check_branch
          %201 = sbr.rel (%p199) target = $region32
        $region31: #{tpu_custom_call.1} parent=11 // pred_region
          _
        $region32: #{tpu_custom_call.1} parent=11 // pred_fallthru
          _
      $region12: #{tpu_custom_call.1} parent=5 // pred_fallthru
        _
      %p202 = scmp.lt.s32.totalorder %s15, 2
      // Predicated region
      $region33: #{tpu_custom_call.1} parent=5 // pred_check
        %p203 = pneg %p202
      $region34: #{tpu_custom_call.1} parent=5 // pred_check_branch
        %205 = sbr.rel (%p203) target = $region36
      $region35: #{tpu_custom_call.1} parent=5 // pred_region
        // Predicated region
        $region37: #{tpu_custom_call.1} parent=35 // pred_check
          %p206 = pneg %p35
        $region38: #{tpu_custom_call.1} parent=35 // pred_check_branch
          %208 = sbr.rel (%p206) target = $region40
        $region39: #{tpu_custom_call.1} parent=35 // pred_region
          %s209 = sand.u32 %s25, 1
          %s210 = sand.u32 %s25, 1
          %s211 = smul.addr %s210, 32
          %s212 = scalar_lea.vmem [#allocation2], %s211
          %s213 = smul.u32 2, %s15
          %s214 = ssub.s32 3, %s213
          %p215 = scmp.lt.s32.totalorder %s214, 2
          %s216 = scalar_select %p215, %s214, 2
          %s217 = smul.u32 16, %s216
          %p218 = scmp.ne.s32.totalorder 0, %s217
          %s219 = smul.addr %s213, 4
          %s220 = scalar_lea.vmem %s0, %s219
          %s221 = smul.u32 %s216, 4
          // Predicated region
          $region41: #{tpu_custom_call.1} parent=39 // pred_check
            %p222 = pneg %p218
          $region42: #{tpu_custom_call.1} parent=39 // pred_check_branch
            %224 = sbr.rel (%p222) target = $region44
          $region43: #{tpu_custom_call.1} parent=39 // pred_region
            %p225 = scmp.lt.u32.totalorder %s221, 8
            %p226 = pneg %p225
            // Predicated region
            $region45: #{tpu_custom_call.1} parent=43 // pred_check
              _
            $region46: #{tpu_custom_call.1} parent=43 // pred_check_branch
              %228 = sbr.rel (%p225) target = $region48
            $region47: #{tpu_custom_call.1} parent=43 // pred_region
              %s250 = sand.u32 %s221, 7
              %p251 = scmp.eq.s32.totalorder %s250, 0
              // Predicated region
              $region60: #{tpu_custom_call.1} parent=47 // pred_check
                %p252 = pneg %p251
              $region61: #{tpu_custom_call.1} parent=47 // pred_check_branch
                %254 = sbr.rel (%p252) target = $region63
              $region62: #{tpu_custom_call.1} parent=47 // pred_region
                %s255 = sshrl.u32 %s221, 3
                %s256 = sshrl.u32 %s255, 3
                // While loop
                $region64: #{tpu_custom_call.1} parent=62 // loop_pre_header
                  _
                $region65: #{tpu_custom_call.1} parent=62 // loop_header
                  %s258 = sphi 0, %s260
                  %p259 = scmp.ge.s32.totalorder %s258, %s256
                  %s263 = sphi 0, %s332
                  %s264 = sphi %s220, %s335
                  %s265 = sphi %s212, %s336
                $region66: #{tpu_custom_call.1} parent=62 // loop_header_branch
                  %262 = sbr.rel (%p259) target = $region70
                $region67: #{tpu_custom_call.1} parent=62 // loop_body
                  %v266 = vld [vmem:[%s264] sm:$0xff]
                  %267 = vst [vmem:[%s265] sm:$0xff] %v266
                  %v268 = vld [vmem:[%s264 + $0x8] sm:$0xff]
                  %269 = vst [vmem:[%s265 + $0x8] sm:$0xff] %v268
                  %v270 = vld [vmem:[%s264 + $0x10] sm:$0xff]
                  %271 = vst [vmem:[%s265 + $0x10] sm:$0xff] %v270
                  %v272 = vld [vmem:[%s264 + $0x18] sm:$0xff]
                  %273 = vst [vmem:[%s265 + $0x18] sm:$0xff] %v272
                  %v274 = vld [vmem:[%s264 + $0x20] sm:$0xff]
                  %275 = vst [vmem:[%s265 + $0x20] sm:$0xff] %v274
                  %v276 = vld [vmem:[%s264 + $0x28] sm:$0xff]
                  %277 = vst [vmem:[%s265 + $0x28] sm:$0xff] %v276
                  %v278 = vld [vmem:[%s264 + $0x30] sm:$0xff]
                  %279 = vst [vmem:[%s265 + $0x30] sm:$0xff] %v278
                  %v280 = vld [vmem:[%s264 + $0x38] sm:$0xff]
                  %281 = vst [vmem:[%s265 + $0x38] sm:$0xff] %v280
                  %v282 = vld [vmem:[%s264 + $0xc] sm:$0xff]
                  %283 = vst [vmem:[%s265 + $0x8] sm:$0xff] %v282
                  %v284 = vld [vmem:[%s264 + $0x14] sm:$0xff]
                  %285 = vst [vmem:[%s265 + $0x10] sm:$0xff] %v284
                  %v286 = vld [vmem:[%s264 + $0x1c] sm:$0xff]
                  %287 = vst [vmem:[%s265 + $0x18] sm:$0xff] %v286
                  %v288 = vld [vmem:[%s264 + $0x24] sm:$0xff]
                  %289 = vst [vmem:[%s265 + $0x20] sm:$0xff] %v288
                  %v290 = vld [vmem:[%s264 + $0x2c] sm:$0xff]
                  %291 = vst [vmem:[%s265 + $0x28] sm:$0xff] %v290
                  %v292 = vld [vmem:[%s264 + $0x34] sm:$0xff]
                  %293 = vst [vmem:[%s265 + $0x30] sm:$0xff] %v292
                  %v294 = vld [vmem:[%s264 + $0x3c] sm:$0xff]
                  %295 = vst [vmem:[%s265 + $0x38] sm:$0xff] %v294
                  %v296 = vld [vmem:[%s264 + $0x44] sm:$0xff]
                  %297 = vst [vmem:[%s265 + $0x40] sm:$0xff] %v296
                  %v298 = vld [vmem:[%s264 + $0x18] sm:$0xff]
                  %299 = vst [vmem:[%s265 + $0x10] sm:$0xff] %v298
                  %v300 = vld [vmem:[%s264 + $0x20] sm:$0xff]
                  %301 = vst [vmem:[%s265 + $0x18] sm:$0xff] %v300
                  %v302 = vld [vmem:[%s264 + $0x28] sm:$0xff]
                  %303 = vst [vmem:[%s265 + $0x20] sm:$0xff] %v302
                  %v304 = vld [vmem:[%s264 + $0x30] sm:$0xff]
                  %305 = vst [vmem:[%s265 + $0x28] sm:$0xff] %v304
                  %v306 = vld [vmem:[%s264 + $0x38] sm:$0xff]
                  %307 = vst [vmem:[%s265 + $0x30] sm:$0xff] %v306
                  %v308 = vld [vmem:[%s264 + $0x40] sm:$0xff]
                  %309 = vst [vmem:[%s265 + $0x38] sm:$0xff] %v308
                  %v310 = vld [vmem:[%s264 + $0x48] sm:$0xff]
                  %311 = vst [vmem:[%s265 + $0x40] sm:$0xff] %v310
                  %v312 = vld [vmem:[%s264 + $0x50] sm:$0xff]
                  %313 = vst [vmem:[%s265 + $0x48] sm:$0xff] %v312
                  %v314 = vld [vmem:[%s264 + $0x24] sm:$0xff]
                  %315 = vst [vmem:[%s265 + $0x18] sm:$0xff] %v314
                  %v316 = vld [vmem:[%s264 + $0x2c] sm:$0xff]
                  %317 = vst [vmem:[%s265 + $0x20] sm:$0xff] %v316
                  %v318 = vld [vmem:[%s264 + $0x34] sm:$0xff]
                  %319 = vst [vmem:[%s265 + $0x28] sm:$0xff] %v318
                  %v320 = vld [vmem:[%s264 + $0x3c] sm:$0xff]
                  %321 = vst [vmem:[%s265 + $0x30] sm:$0xff] %v320
                  %v322 = vld [vmem:[%s264 + $0x44] sm:$0xff]
                  %323 = vst [vmem:[%s265 + $0x38] sm:$0xff] %v322
                  %v324 = vld [vmem:[%s264 + $0x4c] sm:$0xff]
                  %325 = vst [vmem:[%s265 + $0x40] sm:$0xff] %v324
                  %v326 = vld [vmem:[%s264 + $0x54] sm:$0xff]
                  %327 = vst [vmem:[%s265 + $0x48] sm:$0xff] %v326
                  %v328 = vld [vmem:[%s264 + $0x5c] sm:$0xff]
                  %329 = vst [vmem:[%s265 + $0x50] sm:$0xff] %v328
                  %s330 = sadd.s32 1, %s263
                  %p331 = scmp.ge.s32.totalorder %s330, %s256
                  %s332 = scalar_select %p331, 0, %s330
                  %s333 = smul.u32 %s332, 64
                  %s334 = smul.u32 %s332, 64
                  %s335 = scalar_lea.vmem %s220, %s333
                  %s336 = scalar_lea.vmem %s212, %s334 [#allocation2]
                $region68: #{tpu_custom_call.1} parent=62 // loop_footer
                  %s260 = sadd.s32 %s258, 1
                $region69: #{tpu_custom_call.1} parent=62 // loop_footer_branch
                  %257 = sbr.rel target = $region65
                $region70: #{tpu_custom_call.1} parent=62 // loop_exit
                  _
                %s337 = sshrl.u32 %s255, 3
                %s338 = sand.u32 %s255, 7
                %s339 = smul.u32 %s337, 8
                %s340 = smul.u32 8, %s339
                %s341 = scalar_lea.vmem %s220, %s340
                %s342 = smul.u32 8, %s339
                %s343 = scalar_lea.vmem %s212, %s342 [#allocation2]
                // While loop
                $region71: #{tpu_custom_call.1} parent=62 // loop_pre_header
                  _
                $region72: #{tpu_custom_call.1} parent=62 // loop_header
                  %s345 = sphi 0, %s347
                  %p346 = scmp.ge.s32.totalorder %s345, %s338
                  %s350 = sphi 0, %s363
                  %s351 = sphi %s341, %s366
                  %s352 = sphi %s343, %s367
                $region73: #{tpu_custom_call.1} parent=62 // loop_header_branch
                  %349 = sbr.rel (%p346) target = $region77
                $region74: #{tpu_custom_call.1} parent=62 // loop_body
                  %v353 = vld [vmem:[%s351] sm:$0xff]
                  %354 = vst [vmem:[%s352] sm:$0xff] %v353
                  %v355 = vld [vmem:[%s351 + $0xc] sm:$0xff]
                  %356 = vst [vmem:[%s352 + $0x8] sm:$0xff] %v355
                  %v357 = vld [vmem:[%s351 + $0x18] sm:$0xff]
                  %358 = vst [vmem:[%s352 + $0x10] sm:$0xff] %v357
                  %v359 = vld [vmem:[%s351 + $0x24] sm:$0xff]
                  %360 = vst [vmem:[%s352 + $0x18] sm:$0xff] %v359
                  %s361 = sadd.s32 1, %s350
                  %p362 = scmp.ge.s32.totalorder %s361, %s338
                  %s363 = scalar_select %p362, 0, %s361
                  %s364 = smul.u32 %s363, 8
                  %s365 = smul.u32 %s363, 8
                  %s366 = scalar_lea.vmem %s341, %s364
                  %s367 = scalar_lea.vmem %s343, %s365 [#allocation2]
                $region75: #{tpu_custom_call.1} parent=62 // loop_footer
                  %s347 = sadd.s32 %s345, 1
                $region76: #{tpu_custom_call.1} parent=62 // loop_footer_branch
                  %344 = sbr.rel target = $region72
                $region77: #{tpu_custom_call.1} parent=62 // loop_exit
                  _
              $region63: #{tpu_custom_call.1} parent=47 // pred_fallthru
                _
              %p368 = pneg %p251
              // Predicated region
              $region78: #{tpu_custom_call.1} parent=47 // pred_check
                _
              $region79: #{tpu_custom_call.1} parent=47 // pred_check_branch
                %370 = sbr.rel (%p251) target = $region81
              $region80: #{tpu_custom_call.1} parent=47 // pred_region
                %s371 = sand.u32 %s221, 7
                %s372 = ssub.s32 %s221, %s371
                %s373 = scalar_lea.vmem %s220, %s372
                %s374 = ssub.s32 %s221, %s371
                %s375 = scalar_lea.vmem %s212, %s374 [#allocation2]
                %s376 = sshrl.u32 %s221, 3
                %s377 = sshrl.u32 %s376, 3
                // While loop
                $region82: #{tpu_custom_call.1} parent=80 // loop_pre_header
                  _
                $region83: #{tpu_custom_call.1} parent=80 // loop_header
                  %s379 = sphi 0, %s381
                  %p380 = scmp.ge.s32.totalorder %s379, %s377
                  %s384 = sphi 0, %s453
                  %s385 = sphi %s220, %s456
                  %s386 = sphi %s212, %s457
                $region84: #{tpu_custom_call.1} parent=80 // loop_header_branch
                  %383 = sbr.rel (%p380) target = $region88
                $region85: #{tpu_custom_call.1} parent=80 // loop_body
                  %v387 = vld [vmem:[%s385] sm:$0xff]
                  %388 = vst [vmem:[%s386] sm:$0xff] %v387
                  %v389 = vld [vmem:[%s385 + $0x8] sm:$0xff]
                  %390 = vst [vmem:[%s386 + $0x8] sm:$0xff] %v389
                  %v391 = vld [vmem:[%s385 + $0x10] sm:$0xff]
                  %392 = vst [vmem:[%s386 + $0x10] sm:$0xff] %v391
                  %v393 = vld [vmem:[%s385 + $0x18] sm:$0xff]
                  %394 = vst [vmem:[%s386 + $0x18] sm:$0xff] %v393
                  %v395 = vld [vmem:[%s385 + $0x20] sm:$0xff]
                  %396 = vst [vmem:[%s386 + $0x20] sm:$0xff] %v395
                  %v397 = vld [vmem:[%s385 + $0x28] sm:$0xff]
                  %398 = vst [vmem:[%s386 + $0x28] sm:$0xff] %v397
                  %v399 = vld [vmem:[%s385 + $0x30] sm:$0xff]
                  %400 = vst [vmem:[%s386 + $0x30] sm:$0xff] %v399
                  %v401 = vld [vmem:[%s385 + $0x38] sm:$0xff]
                  %402 = vst [vmem:[%s386 + $0x38] sm:$0xff] %v401
                  %v403 = vld [vmem:[%s385 + $0xc] sm:$0xff]
                  %404 = vst [vmem:[%s386 + $0x8] sm:$0xff] %v403
                  %v405 = vld [vmem:[%s385 + $0x14] sm:$0xff]
                  %406 = vst [vmem:[%s386 + $0x10] sm:$0xff] %v405
                  %v407 = vld [vmem:[%s385 + $0x1c] sm:$0xff]
                  %408 = vst [vmem:[%s386 + $0x18] sm:$0xff] %v407
                  %v409 = vld [vmem:[%s385 + $0x24] sm:$0xff]
                  %410 = vst [vmem:[%s386 + $0x20] sm:$0xff] %v409
                  %v411 = vld [vmem:[%s385 + $0x2c] sm:$0xff]
                  %412 = vst [vmem:[%s386 + $0x28] sm:$0xff] %v411
                  %v413 = vld [vmem:[%s385 + $0x34] sm:$0xff]
                  %414 = vst [vmem:[%s386 + $0x30] sm:$0xff] %v413
                  %v415 = vld [vmem:[%s385 + $0x3c] sm:$0xff]
                  %416 = vst [vmem:[%s386 + $0x38] sm:$0xff] %v415
                  %v417 = vld [vmem:[%s385 + $0x44] sm:$0xff]
                  %418 = vst [vmem:[%s386 + $0x40] sm:$0xff] %v417
                  %v419 = vld [vmem:[%s385 + $0x18] sm:$0xff]
                  %420 = vst [vmem:[%s386 + $0x10] sm:$0xff] %v419
                  %v421 = vld [vmem:[%s385 + $0x20] sm:$0xff]
                  %422 = vst [vmem:[%s386 + $0x18] sm:$0xff] %v421
                  %v423 = vld [vmem:[%s385 + $0x28] sm:$0xff]
                  %424 = vst [vmem:[%s386 + $0x20] sm:$0xff] %v423
                  %v425 = vld [vmem:[%s385 + $0x30] sm:$0xff]
                  %426 = vst [vmem:[%s386 + $0x28] sm:$0xff] %v425
                  %v427 = vld [vmem:[%s385 + $0x38] sm:$0xff]
                  %428 = vst [vmem:[%s386 + $0x30] sm:$0xff] %v427
                  %v429 = vld [vmem:[%s385 + $0x40] sm:$0xff]
                  %430 = vst [vmem:[%s386 + $0x38] sm:$0xff] %v429
                  %v431 = vld [vmem:[%s385 + $0x48] sm:$0xff]
                  %432 = vst [vmem:[%s386 + $0x40] sm:$0xff] %v431
                  %v433 = vld [vmem:[%s385 + $0x50] sm:$0xff]
                  %434 = vst [vmem:[%s386 + $0x48] sm:$0xff] %v433
                  %v435 = vld [vmem:[%s385 + $0x24] sm:$0xff]
                  %436 = vst [vmem:[%s386 + $0x18] sm:$0xff] %v435
                  %v437 = vld [vmem:[%s385 + $0x2c] sm:$0xff]
                  %438 = vst [vmem:[%s386 + $0x20] sm:$0xff] %v437
                  %v439 = vld [vmem:[%s385 + $0x34] sm:$0xff]
                  %440 = vst [vmem:[%s386 + $0x28] sm:$0xff] %v439
                  %v441 = vld [vmem:[%s385 + $0x3c] sm:$0xff]
                  %442 = vst [vmem:[%s386 + $0x30] sm:$0xff] %v441
                  %v443 = vld [vmem:[%s385 + $0x44] sm:$0xff]
                  %444 = vst [vmem:[%s386 + $0x38] sm:$0xff] %v443
                  %v445 = vld [vmem:[%s385 + $0x4c] sm:$0xff]
                  %446 = vst [vmem:[%s386 + $0x40] sm:$0xff] %v445
                  %v447 = vld [vmem:[%s385 + $0x54] sm:$0xff]
                  %448 = vst [vmem:[%s386 + $0x48] sm:$0xff] %v447
                  %v449 = vld [vmem:[%s385 + $0x5c] sm:$0xff]
                  %450 = vst [vmem:[%s386 + $0x50] sm:$0xff] %v449
                  %s451 = sadd.s32 1, %s384
                  %p452 = scmp.ge.s32.totalorder %s451, %s377
                  %s453 = scalar_select %p452, 0, %s451
                  %s454 = smul.u32 %s453, 64
                  %s455 = smul.u32 %s453, 64
                  %s456 = scalar_lea.vmem %s220, %s454
                  %s457 = scalar_lea.vmem %s212, %s455 [#allocation2]
                $region86: #{tpu_custom_call.1} parent=80 // loop_footer
                  %s381 = sadd.s32 %s379, 1
                $region87: #{tpu_custom_call.1} parent=80 // loop_footer_branch
                  %378 = sbr.rel target = $region83
                $region88: #{tpu_custom_call.1} parent=80 // loop_exit
                  _
                %s458 = sshrl.u32 %s376, 3
                %s459 = sand.u32 %s376, 7
                %s460 = smul.u32 %s458, 8
                %s461 = smul.u32 8, %s460
                %s462 = scalar_lea.vmem %s220, %s461
                %s463 = smul.u32 8, %s460
                %s464 = scalar_lea.vmem %s212, %s463 [#allocation2]
                // While loop
                $region89: #{tpu_custom_call.1} parent=80 // loop_pre_header
                  _
                $region90: #{tpu_custom_call.1} parent=80 // loop_header
                  %s466 = sphi 0, %s468
                  %p467 = scmp.ge.s32.totalorder %s466, %s459
                  %s471 = sphi 0, %s484
                  %s472 = sphi %s462, %s487
                  %s473 = sphi %s464, %s488
                $region91: #{tpu_custom_call.1} parent=80 // loop_header_branch
                  %470 = sbr.rel (%p467) target = $region95
                $region92: #{tpu_custom_call.1} parent=80 // loop_body
                  %v474 = vld [vmem:[%s472] sm:$0xff]
                  %475 = vst [vmem:[%s473] sm:$0xff] %v474
                  %v476 = vld [vmem:[%s472 + $0xc] sm:$0xff]
                  %477 = vst [vmem:[%s473 + $0x8] sm:$0xff] %v476
                  %v478 = vld [vmem:[%s472 + $0x18] sm:$0xff]
                  %479 = vst [vmem:[%s473 + $0x10] sm:$0xff] %v478
                  %v480 = vld [vmem:[%s472 + $0x24] sm:$0xff]
                  %481 = vst [vmem:[%s473 + $0x18] sm:$0xff] %v480
                  %s482 = sadd.s32 1, %s471
                  %p483 = scmp.ge.s32.totalorder %s482, %s459
                  %s484 = scalar_select %p483, 0, %s482
                  %s485 = smul.u32 %s484, 8
                  %s486 = smul.u32 %s484, 8
                  %s487 = scalar_lea.vmem %s462, %s485
                  %s488 = scalar_lea.vmem %s464, %s486 [#allocation2]
                $region93: #{tpu_custom_call.1} parent=80 // loop_footer
                  %s468 = sadd.s32 %s466, 1
                $region94: #{tpu_custom_call.1} parent=80 // loop_footer_branch
                  %465 = sbr.rel target = $region90
                $region95: #{tpu_custom_call.1} parent=80 // loop_exit
                  _
                %s489 = sshll.u32 1, %s371
                %s490 = ssub.s32 %s489, 1
                loop: start=0, step=1, limit=1
                $region96: #{tpu_custom_call.1} parent=80 // loop_pre_header
                  _
                $region97: #{tpu_custom_call.1} parent=80 // loop_header
                  %s492 = sphi 0, %s496
                  %p493 = scmp.ge.s32.totalorder %s492, 1
                  %s497 = sphi %s373, %s373
                  %s498 = sphi %s375, %s375
                $region98: #{tpu_custom_call.1} parent=80 // loop_header_branch
                  %495 = sbr.rel (%p493) target = $region102
                $region99: #{tpu_custom_call.1} parent=80 // loop_body
                  %v499 = vld [vmem:[%s497] sm:%s490]
                  %500 = vst [vmem:[%s498] sm:%s490] %v499
                  %v501 = vld [vmem:[%s497 + $0xc] sm:%s490]
                  %502 = vst [vmem:[%s498 + $0x8] sm:%s490] %v501
                  %v503 = vld [vmem:[%s497 + $0x18] sm:%s490]
                  %504 = vst [vmem:[%s498 + $0x10] sm:%s490] %v503
                  %v505 = vld [vmem:[%s497 + $0x24] sm:%s490]
                  %506 = vst [vmem:[%s498 + $0x18] sm:%s490] %v505
                $region100: #{tpu_custom_call.1} parent=80 // loop_footer
                  %s496 = sadd.s32 1, %s492
                $region101: #{tpu_custom_call.1} parent=80 // loop_footer_branch
                  %491 = sbr.rel target = $region97
                $region102: #{tpu_custom_call.1} parent=80 // loop_exit
                  _
              $region81: #{tpu_custom_call.1} parent=47 // pred_fallthru
                _
            $region48: #{tpu_custom_call.1} parent=43 // pred_fallthru
              _
            // Predicated region
            $region49: #{tpu_custom_call.1} parent=43 // pred_check
              %p229 = pneg %p225
            $region50: #{tpu_custom_call.1} parent=43 // pred_check_branch
              %231 = sbr.rel (%p229) target = $region52
            $region51: #{tpu_custom_call.1} parent=43 // pred_region
              %s232 = sshll.u32 1, %s221
              %s233 = ssub.s32 %s232, 1
              loop: start=0, step=1, limit=1
              $region53: #{tpu_custom_call.1} parent=51 // loop_pre_header
                _
              $region54: #{tpu_custom_call.1} parent=51 // loop_header
                %s235 = sphi 0, %s239
                %p236 = scmp.ge.s32.totalorder %s235, 1
                %s240 = sphi %s220, %s220
                %s241 = sphi %s212, %s212
              $region55: #{tpu_custom_call.1} parent=51 // loop_header_branch
                %238 = sbr.rel (%p236) target = $region59
              $region56: #{tpu_custom_call.1} parent=51 // loop_body
                %v242 = vld [vmem:[%s240] sm:%s233]
                %243 = vst [vmem:[%s241] sm:%s233] %v242
                %v244 = vld [vmem:[%s240 + $0xc] sm:%s233]
                %245 = vst [vmem:[%s241 + $0x8] sm:%s233] %v244
                %v246 = vld [vmem:[%s240 + $0x18] sm:%s233]
                %247 = vst [vmem:[%s241 + $0x10] sm:%s233] %v246
                %v248 = vld [vmem:[%s240 + $0x24] sm:%s233]
                %249 = vst [vmem:[%s241 + $0x18] sm:%s233] %v248
              $region57: #{tpu_custom_call.1} parent=51 // loop_footer
                %s239 = sadd.s32 1, %s235
              $region58: #{tpu_custom_call.1} parent=51 // loop_footer_branch
                %234 = sbr.rel target = $region54
              $region59: #{tpu_custom_call.1} parent=51 // loop_exit
                _
            $region52: #{tpu_custom_call.1} parent=43 // pred_fallthru
              _
          $region44: #{tpu_custom_call.1} parent=39 // pred_fallthru
            _
          %507 = vnop
        $region40: #{tpu_custom_call.1} parent=35 // pred_fallthru
          _
      $region36: #{tpu_custom_call.1} parent=5 // pred_fallthru
        _
      %p508 = scmp.le.s32.totalorder 1, %s15
      %p509 = scmp.lt.s32.totalorder %s15, 3
      %p510 = pnand %p508, %p509
      %p511 = pneg %p510
      // Predicated region
      $region103: #{tpu_custom_call.1} parent=5 // pred_check
        _
      $region104: #{tpu_custom_call.1} parent=5 // pred_check_branch
        %513 = sbr.rel (%p510) target = $region106
      $region105: #{tpu_custom_call.1} parent=5 // pred_region
        %s514 = ssub.s32 %s15, 1
        %s515 = sand.u32 %s28, 1
        %s516 = sand.u32 %s28, 1
        %s517 = smul.addr %s516, 32
        %s518 = scalar_lea.vmem [#allocation2], %s517
        // Predicated region
        $region107: #{tpu_custom_call.1} parent=105 // pred_check
          %p519 = pneg %p41
        $region108: #{tpu_custom_call.1} parent=105 // pred_check_branch
          %521 = sbr.rel (%p519) target = $region110
        $region109: #{tpu_custom_call.1} parent=105 // pred_region
          _
        $region110: #{tpu_custom_call.1} parent=105 // pred_fallthru
          _
        %s522 = sand.u32 %s28, 1
        %s523 = sand.u32 %s28, 1
        %s524 = smul.addr %s523, 32
        %s525 = scalar_lea.vmem [#allocation2], %s524
        %p526 = pneg %p41
        %p527 = pneg %p38
        %p528 = pneg %p62
        %p529 = pneg %p59
        %p530 = pneg %p83
        %p531 = pneg %p80
        %p532 = pneg %p104
        %p533 = pneg %p101
        %p534 = pneg %p125
        %p535 = pneg %p122
        %p536 = pneg %p146
        %p537 = pneg %p143
        %p538 = pneg %p172
        %p539 = pneg %p169
        %s540 = sand.u32 %s159, 1
        %s541 = scalar_lea.sflag [#allocation4], %s540
        %s542 = sand.u32 %s159, 1
        %s543 = smul.addr %s542, 2
        %s544 = scalar_lea.vmem [#allocation3], %s543
        %s545 = smul.u32 2, %s20
        %s546 = ssub.s32 3, %s545
        %p547 = scmp.lt.s32.totalorder %s546, 2
        %s548 = scalar_select %p547, %s546, 2
        %s549 = smul.u32 16, %s548
        %s550 = smul.u32 2, %s20
        %s551 = ssub.s32 3, %s550
        %p552 = scmp.lt.s32.totalorder %s551, 2
        %s553 = scalar_select %p552, %s551, 2
        %v555 = vld [vmem:[%s518] sm:$0xff]
        %v556 = vld [vmem:[%s518 + $0x8] sm:$0xff]
        %v557 = vld [vmem:[%s518 + $0x10] sm:$0xff]
        %v558 = vld [vmem:[%s518 + $0x18] sm:$0xff]
        %v559 = vld [vmem:[%s5] sm:$0xff]
        %v560 = vld [vmem:[%s5 + $0x8] sm:$0xff]
        %v561 = vld [vmem:[%s5 + $0x10] sm:$0xff]
        %v562 = vld [vmem:[%s5 + $0x18] sm:$0xff]
        %v563 = vld [vmem:[%s5 + $0x20] sm:$0xff]
        %v564 = vld [vmem:[%s5 + $0x28] sm:$0xff]
        %v565 = vld [vmem:[%s5 + $0x30] sm:$0xff]
        %v566 = vld [vmem:[%s5 + $0x38] sm:$0xff]
        %v567 = vld [vmem:[%s1] sm:$0xf]
        %v568 = vld [vmem:[%s1 + $0x4] sm:$0xf]
        %v569 = vld [vmem:[%s1 + $0x8] sm:$0xf]
        %v570 = vld [vmem:[%s1 + $0xc] sm:$0xf]
        %v571 = vld [vmem:[%s1 + $0x10] sm:$0xf]
        %v572 = vld [vmem:[%s1 + $0x14] sm:$0xf]
        %v573 = vld [vmem:[%s1 + $0x18] sm:$0xf]
        %v574 = vld [vmem:[%s1 + $0x1c] sm:$0xf]
        %v575 = vld [vmem:[%s1 + $0x20] sm:$0xf]
        %v576 = vld [vmem:[%s1 + $0x24] sm:$0xf]
        %v577 = vld [vmem:[%s1 + $0x28] sm:$0xf]
        %v578 = vld [vmem:[%s1 + $0x2c] sm:$0xf]
        %v579 = vld [vmem:[%s1 + $0x30] sm:$0xf]
        %v580 = vld [vmem:[%s1 + $0x34] sm:$0xf]
        %v581 = vld [vmem:[%s1 + $0x38] sm:$0xf]
        %v582 = vld [vmem:[%s1 + $0x3c] sm:$0xf]
        %v599 = vunpack.c.l.b16 %v567
        %v600 = vunpack.c.l.b16 %v568
        %v601 = vunpack.c.l.b16 %v569
        %v602 = vunpack.c.l.b16 %v570
        %v603 = vunpack.c.l.b16 %v571
        %v604 = vunpack.c.l.b16 %v572
        %v605 = vunpack.c.l.b16 %v573
        %v606 = vunpack.c.l.b16 %v574
        %v607 = vunpack.c.l.b16 %v575
        %v608 = vunpack.c.l.b16 %v576
        %v609 = vunpack.c.l.b16 %v577
        %v610 = vunpack.c.l.b16 %v578
        %v611 = vunpack.c.l.b16 %v579
        %v612 = vunpack.c.l.b16 %v580
        %v613 = vunpack.c.l.b16 %v581
        %v614 = vunpack.c.l.b16 %v582
        %v615 = vpack.c.b16 %v600, %v599
        %v616 = vpack.c.b16 %v602, %v601
        %v617 = vpack.c.b16 %v604, %v603
        %v618 = vpack.c.b16 %v606, %v605
        %v619 = vpack.c.b16 %v608, %v607
        %v620 = vpack.c.b16 %v610, %v609
        %v621 = vpack.c.b16 %v612, %v611
        %v622 = vpack.c.b16 %v614, %v613
        %v627 = vunpack.c.l.b16 %v555
        %v628 = vunpack.c.h.b16 %v555
        %v629 = vunpack.c.l.b16 %v556
        %v630 = vunpack.c.h.b16 %v556
        %v631 = vunpack.c.l.b16 %v557
        %v632 = vunpack.c.h.b16 %v557
        %v633 = vunpack.c.l.b16 %v558
        %v634 = vunpack.c.h.b16 %v558
        %v635 = vpack.c.b16 %v629, %v627
        %v636 = vpack.c.b16 %v630, %v628
        %v637 = vpack.c.b16 %v633, %v631
        %v638 = vpack.c.b16 %v634, %v632
        %vm643 = vcmask 261120
        %v645 = vsel %vm643, %v615, 0
        %v648 = vsel %vm643, %v616, 0
        %v651 = vsel %vm643, %v617, 0
        %v654 = vsel %vm643, %v618, 0
        %v657 = vsel %vm643, %v619, 0
        %v660 = vsel %vm643, %v620, 0
        %v663 = vsel %vm643, %v621, 0
        %v666 = vsel %vm643, %v622, 0
        %668 = vmatpush.bf16.msra.mxu0 0
        %669 = vmatpush.bf16.msra.mxu0 0
        %670 = vmatpush.bf16.msra.mxu0 0
        %671 = vmatpush.bf16.msra.mxu0 0
        %672 = vmatpush.bf16.msra.mxu0 0
        %673 = vmatpush.bf16.msra.mxu0 0
        %674 = vmatpush.bf16.msra.mxu0 %v637
        %675 = vmatpush.bf16.msra.mxu0 %v635
        %676 = vmatmul.bf16.gmra.mxu0 %v645
        %v677 = vpop.f32.mrf.mxu0
        %v678 = vadd.f32 0.0, %v677
        %v679 = vpop.f32.mrf.mxu0
        %v680 = vadd.f32 0.0, %v679
        %681 = vmatmul.bf16.gmra.mxu0 %v648
        %v682 = vpop.f32.mrf.mxu0
        %v683 = vadd.f32 0.0, %v682
        %v684 = vpop.f32.mrf.mxu0
        %v685 = vadd.f32 0.0, %v684
        %686 = vmatmul.bf16.gmra.mxu0 %v651
        %v687 = vpop.f32.mrf.mxu0
        %v688 = vadd.f32 0.0, %v687
        %v689 = vpop.f32.mrf.mxu0
        %v690 = vadd.f32 0.0, %v689
        %691 = vmatmul.bf16.gmra.mxu0 %v654
        %v692 = vpop.f32.mrf.mxu0
        %v693 = vadd.f32 0.0, %v692
        %v694 = vpop.f32.mrf.mxu0
        %v695 = vadd.f32 0.0, %v694
        %696 = vmatmul.bf16.gmra.mxu0 %v657
        %v697 = vpop.f32.mrf.mxu0
        %v698 = vadd.f32 0.0, %v697
        %v699 = vpop.f32.mrf.mxu0
        %v700 = vadd.f32 0.0, %v699
        %701 = vmatmul.bf16.gmra.mxu0 %v660
        %v702 = vpop.f32.mrf.mxu0
        %v703 = vadd.f32 0.0, %v702
        %v704 = vpop.f32.mrf.mxu0
        %v705 = vadd.f32 0.0, %v704
        %706 = vmatmul.bf16.gmra.mxu0 %v663
        %v707 = vpop.f32.mrf.mxu0
        %v708 = vadd.f32 0.0, %v707
        %v709 = vpop.f32.mrf.mxu0
        %v710 = vadd.f32 0.0, %v709
        %711 = vmatmul.bf16.gmra.mxu0 %v666
        %v712 = vpop.f32.mrf.mxu0
        %v713 = vadd.f32 0.0, %v712
        %v714 = vpop.f32.mrf.mxu0
        %v715 = vadd.f32 0.0, %v714
        %716 = vdwg.mxu0
        %717 = vmatpush.bf16.msra.mxu0 0
        %718 = vmatpush.bf16.msra.mxu0 0
        %719 = vmatpush.bf16.msra.mxu0 0
        %720 = vmatpush.bf16.msra.mxu0 0
        %721 = vmatpush.bf16.msra.mxu0 0
        %722 = vmatpush.bf16.msra.mxu0 0
        %723 = vmatpush.bf16.msra.mxu0 %v638
        %724 = vmatpush.bf16.msra.mxu0 %v636
        %725 = vmatmul.bf16.gmra.mxu0 %v645
        %v726 = vpop.f32.mrf.mxu0
        %v727 = vadd.f32 0.0, %v726
        %v728 = vpop.f32.mrf.mxu0
        %v729 = vadd.f32 0.0, %v728
        %730 = vmatmul.bf16.gmra.mxu0 %v648
        %v731 = vpop.f32.mrf.mxu0
        %v732 = vadd.f32 0.0, %v731
        %v733 = vpop.f32.mrf.mxu0
        %v734 = vadd.f32 0.0, %v733
        %735 = vmatmul.bf16.gmra.mxu0 %v651
        %v736 = vpop.f32.mrf.mxu0
        %v737 = vadd.f32 0.0, %v736
        %v738 = vpop.f32.mrf.mxu0
        %v739 = vadd.f32 0.0, %v738
        %740 = vmatmul.bf16.gmra.mxu0 %v654
        %v741 = vpop.f32.mrf.mxu0
        %v742 = vadd.f32 0.0, %v741
        %v743 = vpop.f32.mrf.mxu0
        %v744 = vadd.f32 0.0, %v743
        %745 = vmatmul.bf16.gmra.mxu0 %v657
        %v746 = vpop.f32.mrf.mxu0
        %v747 = vadd.f32 0.0, %v746
        %v748 = vpop.f32.mrf.mxu0
        %v749 = vadd.f32 0.0, %v748
        %750 = vmatmul.bf16.gmra.mxu0 %v660
        %v751 = vpop.f32.mrf.mxu0
        %v752 = vadd.f32 0.0, %v751
        %v753 = vpop.f32.mrf.mxu0
        %v754 = vadd.f32 0.0, %v753
        %755 = vmatmul.bf16.gmra.mxu0 %v663
        %v756 = vpop.f32.mrf.mxu0
        %v757 = vadd.f32 0.0, %v756
        %v758 = vpop.f32.mrf.mxu0
        %v759 = vadd.f32 0.0, %v758
        %760 = vmatmul.bf16.gmra.mxu0 %v666
        %v761 = vpop.f32.mrf.mxu0
        %v762 = vadd.f32 0.0, %v761
        %v763 = vpop.f32.mrf.mxu0
        %v764 = vadd.f32 0.0, %v763
        %765 = vdwg.mxu0
        %767 = vset.pattern.permute.xlu0 0
        %768 = vperm.xlu0 %767, %v559
        %v769 = vpop.permute.xlu0 %768
        %772 = vset.pattern.permute.xlu0 0
        %773 = vperm.xlu0 %772, %v560
        %v774 = vpop.permute.xlu0 %773
        %777 = vset.pattern.permute.xlu0 0
        %778 = vperm.xlu0 %777, %v561
        %v779 = vpop.permute.xlu0 %778
        %782 = vset.pattern.permute.xlu0 0
        %783 = vperm.xlu0 %782, %v562
        %v784 = vpop.permute.xlu0 %783
        %787 = vset.pattern.permute.xlu0 0
        %788 = vperm.xlu0 %787, %v563
        %v789 = vpop.permute.xlu0 %788
        %792 = vset.pattern.permute.xlu0 0
        %793 = vperm.xlu0 %792, %v564
        %v794 = vpop.permute.xlu0 %793
        %797 = vset.pattern.permute.xlu0 0
        %798 = vperm.xlu0 %797, %v565
        %v799 = vpop.permute.xlu0 %798
        %802 = vset.pattern.permute.xlu0 0
        %803 = vperm.xlu0 %802, %v566
        %v804 = vpop.permute.xlu0 %803
        %v806 = vadd.f32 %v678, %v769
        %v807 = vadd.f32 %v727, %v769
        %v808 = vadd.f32 %v680, %v774
        %v809 = vadd.f32 %v729, %v774
        %v810 = vadd.f32 %v683, %v779
        %v811 = vadd.f32 %v732, %v779
        %v812 = vadd.f32 %v685, %v784
        %v813 = vadd.f32 %v734, %v784
        %v814 = vadd.f32 %v688, %v789
        %v815 = vadd.f32 %v737, %v789
        %v816 = vadd.f32 %v690, %v794
        %v817 = vadd.f32 %v739, %v794
        %v818 = vadd.f32 %v693, %v799
        %v819 = vadd.f32 %v742, %v799
        %v820 = vadd.f32 %v695, %v804
        %v821 = vadd.f32 %v744, %v804
        %v822 = vadd.f32 %v806, %v808
        %v823 = vadd.f32 %v822, %v810
        %v824 = vadd.f32 %v823, %v812
        %v825 = vadd.f32 %v824, %v814
        %v826 = vadd.f32 %v825, %v816
        %v827 = vadd.f32 %v826, %v818
        %v828 = vadd.f32 %v827, %v820
        %v829 = vrot.slane %v828, 4
        %v830 = vadd.f32 %v828, %v829
        %v831 = vrot.slane %v830, 2
        %v832 = vadd.f32 %v830, %v831
        %v833 = vrot.slane %v832, 1
        %v834 = vadd.f32 %v832, %v833
        %v835 = vadd.f32 %v807, %v809
        %v836 = vadd.f32 %v835, %v811
        %v837 = vadd.f32 %v836, %v813
        %v838 = vadd.f32 %v837, %v815
        %v839 = vadd.f32 %v838, %v817
        %v840 = vadd.f32 %v839, %v819
        %v841 = vadd.f32 %v840, %v821
        %v842 = vrot.slane %v841, 4
        %v843 = vadd.f32 %v841, %v842
        %v844 = vrot.slane %v843, 2
        %v845 = vadd.f32 %v843, %v844
        %v846 = vrot.slane %v845, 1
        %v847 = vadd.f32 %v845, %v846
        %v848 = vrcp.pop 64.0
        %v849 = vmul.f32 64.0, %v848
        %v850 = vsub.f32 1.0, %v849
        %v851 = vmul.f32 %v848, %v850
        %v852 = vadd.f32 %v848, %v851
        %vm853 = vweird.f32 %v848
        %v854 = vsel %vm853, %v848, %v852
        %v855 = vmul.f32 %v834, %v854
        %v856 = vmul.f32 %v847, %v854
        %v857 = vmul.f32 %v806, %v806
        %v858 = vmul.f32 %v807, %v807
        %v859 = vmul.f32 %v808, %v808
        %v860 = vmul.f32 %v809, %v809
        %v861 = vmul.f32 %v810, %v810
        %v862 = vmul.f32 %v811, %v811
        %v863 = vmul.f32 %v812, %v812
        %v864 = vmul.f32 %v813, %v813
        %v865 = vmul.f32 %v814, %v814
        %v866 = vmul.f32 %v815, %v815
        %v867 = vmul.f32 %v816, %v816
        %v868 = vmul.f32 %v817, %v817
        %v869 = vmul.f32 %v818, %v818
        %v870 = vmul.f32 %v819, %v819
        %v871 = vmul.f32 %v820, %v820
        %v872 = vmul.f32 %v821, %v821
        %v873 = vadd.f32 %v857, %v859
        %v874 = vadd.f32 %v873, %v861
        %v875 = vadd.f32 %v874, %v863
        %v876 = vadd.f32 %v875, %v865
        %v877 = vadd.f32 %v876, %v867
        %v878 = vadd.f32 %v877, %v869
        %v879 = vadd.f32 %v878, %v871
        %v880 = vrot.slane %v879, 4
        %v881 = vadd.f32 %v879, %v880
        %v882 = vrot.slane %v881, 2
        %v883 = vadd.f32 %v881, %v882
        %v884 = vrot.slane %v883, 1
        %v885 = vadd.f32 %v883, %v884
        %v886 = vadd.f32 %v858, %v860
        %v887 = vadd.f32 %v886, %v862
        %v888 = vadd.f32 %v887, %v864
        %v889 = vadd.f32 %v888, %v866
        %v890 = vadd.f32 %v889, %v868
        %v891 = vadd.f32 %v890, %v870
        %v892 = vadd.f32 %v891, %v872
        %v893 = vrot.slane %v892, 4
        %v894 = vadd.f32 %v892, %v893
        %v895 = vrot.slane %v894, 2
        %v896 = vadd.f32 %v894, %v895
        %v897 = vrot.slane %v896, 1
        %v898 = vadd.f32 %v896, %v897
        %v899 = vmul.f32 %v885, %v854
        %v900 = vmul.f32 %v898, %v854
        %v901 = vmul.f32 %v855, %v855
        %v902 = vmul.f32 %v856, %v856
        %v903 = vsub.f32 %v899, %v901
        %v904 = vsub.f32 %v900, %v902
        %v905 = vadd.f32 %v903, 1e-05
        %v906 = vadd.f32 %v904, 1e-05
        %v907 = vrsqrt.pop %v905
        %v908 = vmul.f32 %v907, %v905
        %v909 = vmul.f32 %v908, %v907
        %v910 = vmul.f32 0.5, %v909
        %v911 = vsub.f32 1.5, %v910
        %v912 = vmul.f32 %v907, %v911
        %vm913 = vweird.f32 %v905
        %vm914 = vweird.f32 %v907
        %vm915 = vmor %vm913, %vm914
        %v916 = vsel %vm915, %v907, %v912
        %v917 = vrsqrt.pop %v906
        %v918 = vmul.f32 %v917, %v906
        %v919 = vmul.f32 %v918, %v917
        %v920 = vmul.f32 0.5, %v919
        %v921 = vsub.f32 1.5, %v920
        %v922 = vmul.f32 %v917, %v921
        %vm923 = vweird.f32 %v906
        %vm924 = vweird.f32 %v917
        %vm925 = vmor %vm923, %vm924
        %v926 = vsel %vm925, %v917, %v922
        %v927 = vsub.f32 %v806, %v855
        %v928 = vsub.f32 %v807, %v856
        %v929 = vsub.f32 %v808, %v855
        %v930 = vsub.f32 %v809, %v856
        %v931 = vsub.f32 %v810, %v855
        %v932 = vsub.f32 %v811, %v856
        %v933 = vsub.f32 %v812, %v855
        %v934 = vsub.f32 %v813, %v856
        %v935 = vsub.f32 %v814, %v855
        %v936 = vsub.f32 %v815, %v856
        %v937 = vsub.f32 %v816, %v855
        %v938 = vsub.f32 %v817, %v856
        %v939 = vsub.f32 %v818, %v855
        %v940 = vsub.f32 %v819, %v856
        %v941 = vsub.f32 %v820, %v855
        %v942 = vsub.f32 %v821, %v856
        %v943 = vmul.f32 %v927, %v916
        %v944 = vmul.f32 %v928, %v926
        %v945 = vmul.f32 %v929, %v916
        %v946 = vmul.f32 %v930, %v926
        %v947 = vmul.f32 %v931, %v916
        %v948 = vmul.f32 %v932, %v926
        %v949 = vmul.f32 %v933, %v916
        %v950 = vmul.f32 %v934, %v926
        %v951 = vmul.f32 %v935, %v916
        %v952 = vmul.f32 %v936, %v926
        %v953 = vmul.f32 %v937, %v916
        %v954 = vmul.f32 %v938, %v926
        %v955 = vmul.f32 %v939, %v916
        %v956 = vmul.f32 %v940, %v926
        %v957 = vmul.f32 %v941, %v916
        %v958 = vmul.f32 %v942, %v926
        %959 = vset.pattern.permute.xlu0 1
        %960 = vperm.xlu0 %959, %v559
        %v961 = vpop.permute.xlu0 %960
        %963 = vset.pattern.permute.xlu0 1
        %964 = vperm.xlu0 %963, %v560
        %v965 = vpop.permute.xlu0 %964
        %967 = vset.pattern.permute.xlu0 1
        %968 = vperm.xlu0 %967, %v561
        %v969 = vpop.permute.xlu0 %968
        %971 = vset.pattern.permute.xlu0 1
        %972 = vperm.xlu0 %971, %v562
        %v973 = vpop.permute.xlu0 %972
        %975 = vset.pattern.permute.xlu0 1
        %976 = vperm.xlu0 %975, %v563
        %v977 = vpop.permute.xlu0 %976
        %979 = vset.pattern.permute.xlu0 1
        %980 = vperm.xlu0 %979, %v564
        %v981 = vpop.permute.xlu0 %980
        %983 = vset.pattern.permute.xlu0 1
        %984 = vperm.xlu0 %983, %v565
        %v985 = vpop.permute.xlu0 %984
        %987 = vset.pattern.permute.xlu0 1
        %988 = vperm.xlu0 %987, %v566
        %v989 = vpop.permute.xlu0 %988
        %v991 = vmul.f32 %v943, %v961
        %v992 = vmul.f32 %v944, %v961
        %v993 = vmul.f32 %v945, %v965
        %v994 = vmul.f32 %v946, %v965
        %v995 = vmul.f32 %v947, %v969
        %v996 = vmul.f32 %v948, %v969
        %v997 = vmul.f32 %v949, %v973
        %v998 = vmul.f32 %v950, %v973
        %v999 = vmul.f32 %v951, %v977
        %v1000 = vmul.f32 %v952, %v977
        %v1001 = vmul.f32 %v953, %v981
        %v1002 = vmul.f32 %v954, %v981
        %v1003 = vmul.f32 %v955, %v985
        %v1004 = vmul.f32 %v956, %v985
        %v1005 = vmul.f32 %v957, %v989
        %v1006 = vmul.f32 %v958, %v989
        %1007 = vset.pattern.permute.xlu0 2
        %1008 = vperm.xlu0 %1007, %v559
        %v1009 = vpop.permute.xlu0 %1008
        %1011 = vset.pattern.permute.xlu0 2
        %1012 = vperm.xlu0 %1011, %v560
        %v1013 = vpop.permute.xlu0 %1012
        %1015 = vset.pattern.permute.xlu0 2
        %1016 = vperm.xlu0 %1015, %v561
        %v1017 = vpop.permute.xlu0 %1016
        %1019 = vset.pattern.permute.xlu0 2
        %1020 = vperm.xlu0 %1019, %v562
        %v1021 = vpop.permute.xlu0 %1020
        %1023 = vset.pattern.permute.xlu0 2
        %1024 = vperm.xlu0 %1023, %v563
        %v1025 = vpop.permute.xlu0 %1024
        %1027 = vset.pattern.permute.xlu0 2
        %1028 = vperm.xlu0 %1027, %v564
        %v1029 = vpop.permute.xlu0 %1028
        %1031 = vset.pattern.permute.xlu0 2
        %1032 = vperm.xlu0 %1031, %v565
        %v1033 = vpop.permute.xlu0 %1032
        %1035 = vset.pattern.permute.xlu0 2
        %1036 = vperm.xlu0 %1035, %v566
        %v1037 = vpop.permute.xlu0 %1036
        %v1039 = vadd.f32 %v991, %v1009
        %v1040 = vadd.f32 %v992, %v1009
        %v1041 = vadd.f32 %v993, %v1013
        %v1042 = vadd.f32 %v994, %v1013
        %v1043 = vadd.f32 %v995, %v1017
        %v1044 = vadd.f32 %v996, %v1017
        %v1045 = vadd.f32 %v997, %v1021
        %v1046 = vadd.f32 %v998, %v1021
        %v1047 = vadd.f32 %v999, %v1025
        %v1048 = vadd.f32 %v1000, %v1025
        %v1049 = vadd.f32 %v1001, %v1029
        %v1050 = vadd.f32 %v1002, %v1029
        %v1051 = vadd.f32 %v1003, %v1033
        %v1052 = vadd.f32 %v1004, %v1033
        %v1053 = vadd.f32 %v1005, %v1037
        %v1054 = vadd.f32 %v1006, %v1037
        %v1055 = vmax.f32 %v1039, 0.0
        %v1056 = vmax.f32 %v1040, 0.0
        %v1057 = vmax.f32 %v1041, 0.0
        %v1058 = vmax.f32 %v1042, 0.0
        %v1059 = vmax.f32 %v1043, 0.0
        %v1060 = vmax.f32 %v1044, 0.0
        %v1061 = vmax.f32 %v1045, 0.0
        %v1062 = vmax.f32 %v1046, 0.0
        %v1063 = vmax.f32 %v1047, 0.0
        %v1064 = vmax.f32 %v1048, 0.0
        %v1065 = vmax.f32 %v1049, 0.0
        %v1066 = vmax.f32 %v1050, 0.0
        %v1067 = vmax.f32 %v1051, 0.0
        %v1068 = vmax.f32 %v1052, 0.0
        %v1069 = vmax.f32 %v1053, 0.0
        %v1070 = vmax.f32 %v1054, 0.0
        %v1071 = vpack.c.bf16 %v1057, %v1055
        %v1072 = vpack.c.bf16 %v1058, %v1056
        %v1073 = vpack.c.bf16 %v1061, %v1059
        %v1074 = vpack.c.bf16 %v1062, %v1060
        %v1075 = vpack.c.bf16 %v1065, %v1063
        %v1076 = vpack.c.bf16 %v1066, %v1064
        %v1077 = vpack.c.bf16 %v1069, %v1067
        %v1078 = vpack.c.bf16 %v1070, %v1068
        %v1079 = vld [vmem:[%s2] sm:$0xf]
        %v1080 = vld [vmem:[%s2 + $0x4] sm:$0xf]
        %v1081 = vld [vmem:[%s2 + $0x8] sm:$0xf]
        %v1082 = vld [vmem:[%s2 + $0xc] sm:$0xf]
        %v1083 = vld [vmem:[%s2 + $0x10] sm:$0xf]
        %v1084 = vld [vmem:[%s2 + $0x14] sm:$0xf]
        %v1085 = vld [vmem:[%s2 + $0x18] sm:$0xf]
        %v1086 = vld [vmem:[%s2 + $0x1c] sm:$0xf]
        %1087 = vset.pattern.permute.xlu0 3
        %1088 = vperm.xlu0 %1087, %v559
        %v1089 = vpop.permute.xlu0 %1088
        %1091 = vset.pattern.permute.xlu0 3
        %1092 = vperm.xlu0 %1091, %v560
        %v1093 = vpop.permute.xlu0 %1092
        %1095 = vset.pattern.permute.xlu0 3
        %1096 = vperm.xlu0 %1095, %v561
        %v1097 = vpop.permute.xlu0 %1096
        %1099 = vset.pattern.permute.xlu0 3
        %1100 = vperm.xlu0 %1099, %v562
        %v1101 = vpop.permute.xlu0 %1100
        %1103 = vset.pattern.permute.xlu0 3
        %1104 = vperm.xlu0 %1103, %v563
        %v1105 = vpop.permute.xlu0 %1104
        %1107 = vset.pattern.permute.xlu0 3
        %1108 = vperm.xlu0 %1107, %v564
        %v1109 = vpop.permute.xlu0 %1108
        %1111 = vset.pattern.permute.xlu0 3
        %1112 = vperm.xlu0 %1111, %v565
        %v1113 = vpop.permute.xlu0 %1112
        %1115 = vset.pattern.permute.xlu0 3
        %1116 = vperm.xlu0 %1115, %v566
        %v1117 = vpop.permute.xlu0 %1116
        %v1127 = vunpack.c.l.b16 %v1079
        %v1128 = vunpack.c.l.b16 %v1080
        %v1129 = vunpack.c.l.b16 %v1081
        %v1130 = vunpack.c.l.b16 %v1082
        %v1131 = vunpack.c.l.b16 %v1083
        %v1132 = vunpack.c.l.b16 %v1084
        %v1133 = vunpack.c.l.b16 %v1085
        %v1134 = vunpack.c.l.b16 %v1086
        %v1135 = vpack.c.b16 %v1128, %v1127
        %v1136 = vpack.c.b16 %v1130, %v1129
        %v1137 = vpack.c.b16 %v1132, %v1131
        %v1138 = vpack.c.b16 %v1134, %v1133
        %vm1139 = vcmask 523264
        %v1141 = vsel %vm1139, %v1135, 0
        %v1144 = vsel %vm1139, %v1136, 0
        %v1147 = vsel %vm1139, %v1137, 0
        %v1150 = vsel %vm1139, %v1138, 0
        %1152 = vmatpush.bf16.msra.mxu0 0
        %1153 = vmatpush.bf16.msra.mxu0 0
        %1154 = vmatpush.bf16.msra.mxu0 0
        %1155 = vmatpush.bf16.msra.mxu0 0
        %1156 = vmatpush.bf16.msra.mxu0 %v1077
        %1157 = vmatpush.bf16.msra.mxu0 %v1075
        %1158 = vmatpush.bf16.msra.mxu0 %v1073
        %1159 = vmatpush.bf16.msra.mxu0 %v1071
        %1160 = vmatmul.bf16.gmra.mxu0 %v1141
        %v1161 = vpop.f32.mrf.mxu0
        %v1162 = vadd.f32 %v1089, %v1161
        %v1163 = vpop.f32.mrf.mxu0
        %v1164 = vadd.f32 %v1093, %v1163
        %1165 = vmatmul.bf16.gmra.mxu0 %v1144
        %v1166 = vpop.f32.mrf.mxu0
        %v1167 = vadd.f32 %v1097, %v1166
        %v1168 = vpop.f32.mrf.mxu0
        %v1169 = vadd.f32 %v1101, %v1168
        %1170 = vmatmul.bf16.gmra.mxu0 %v1147
        %v1171 = vpop.f32.mrf.mxu0
        %v1172 = vadd.f32 %v1105, %v1171
        %v1173 = vpop.f32.mrf.mxu0
        %v1174 = vadd.f32 %v1109, %v1173
        %1175 = vmatmul.bf16.gmra.mxu0 %v1150
        %v1176 = vpop.f32.mrf.mxu0
        %v1177 = vadd.f32 %v1113, %v1176
        %v1178 = vpop.f32.mrf.mxu0
        %v1179 = vadd.f32 %v1117, %v1178
        %1180 = vdwg.mxu0
        %1181 = vmatpush.bf16.msra.mxu0 0
        %1182 = vmatpush.bf16.msra.mxu0 0
        %1183 = vmatpush.bf16.msra.mxu0 0
        %1184 = vmatpush.bf16.msra.mxu0 0
        %1185 = vmatpush.bf16.msra.mxu0 %v1078
        %1186 = vmatpush.bf16.msra.mxu0 %v1076
        %1187 = vmatpush.bf16.msra.mxu0 %v1074
        %1188 = vmatpush.bf16.msra.mxu0 %v1072
        %1189 = vmatmul.bf16.gmra.mxu0 %v1141
        %v1190 = vpop.f32.mrf.mxu0
        %v1191 = vadd.f32 %v1089, %v1190
        %v1192 = vpop.f32.mrf.mxu0
        %v1193 = vadd.f32 %v1093, %v1192
        %1194 = vmatmul.bf16.gmra.mxu0 %v1144
        %v1195 = vpop.f32.mrf.mxu0
        %v1196 = vadd.f32 %v1097, %v1195
        %v1197 = vpop.f32.mrf.mxu0
        %v1198 = vadd.f32 %v1101, %v1197
        %1199 = vmatmul.bf16.gmra.mxu0 %v1147
        %v1200 = vpop.f32.mrf.mxu0
        %v1201 = vadd.f32 %v1105, %v1200
        %v1202 = vpop.f32.mrf.mxu0
        %v1203 = vadd.f32 %v1109, %v1202
        %1204 = vmatmul.bf16.gmra.mxu0 %v1150
        %v1205 = vpop.f32.mrf.mxu0
        %v1206 = vadd.f32 %v1113, %v1205
        %v1207 = vpop.f32.mrf.mxu0
        %v1208 = vadd.f32 %v1117, %v1207
        %1209 = vdwg.mxu0
        %v1210 = vadd.f32 %v1162, %v1164
        %v1211 = vadd.f32 %v1210, %v1167
        %v1212 = vadd.f32 %v1211, %v1169
        %v1213 = vadd.f32 %v1212, %v1172
        %v1214 = vadd.f32 %v1213, %v1174
        %v1215 = vadd.f32 %v1214, %v1177
        %v1216 = vadd.f32 %v1215, %v1179
        %v1217 = vrot.slane %v1216, 4
        %v1218 = vadd.f32 %v1216, %v1217
        %v1219 = vrot.slane %v1218, 2
        %v1220 = vadd.f32 %v1218, %v1219
        %v1221 = vrot.slane %v1220, 1
        %v1222 = vadd.f32 %v1220, %v1221
        %v1223 = vadd.f32 %v1191, %v1193
        %v1224 = vadd.f32 %v1223, %v1196
        %v1225 = vadd.f32 %v1224, %v1198
        %v1226 = vadd.f32 %v1225, %v1201
        %v1227 = vadd.f32 %v1226, %v1203
        %v1228 = vadd.f32 %v1227, %v1206
        %v1229 = vadd.f32 %v1228, %v1208
        %v1230 = vrot.slane %v1229, 4
        %v1231 = vadd.f32 %v1229, %v1230
        %v1232 = vrot.slane %v1231, 2
        %v1233 = vadd.f32 %v1231, %v1232
        %v1234 = vrot.slane %v1233, 1
        %v1235 = vadd.f32 %v1233, %v1234
        %v1236 = vmul.f32 %v1222, %v854
        %v1237 = vmul.f32 %v1235, %v854
        %v1238 = vmul.f32 %v1162, %v1162
        %v1239 = vmul.f32 %v1191, %v1191
        %v1240 = vmul.f32 %v1164, %v1164
        %v1241 = vmul.f32 %v1193, %v1193
        %v1242 = vmul.f32 %v1167, %v1167
        %v1243 = vmul.f32 %v1196, %v1196
        %v1244 = vmul.f32 %v1169, %v1169
        %v1245 = vmul.f32 %v1198, %v1198
        %v1246 = vmul.f32 %v1172, %v1172
        %v1247 = vmul.f32 %v1201, %v1201
        %v1248 = vmul.f32 %v1174, %v1174
        %v1249 = vmul.f32 %v1203, %v1203
        %v1250 = vmul.f32 %v1177, %v1177
        %v1251 = vmul.f32 %v1206, %v1206
        %v1252 = vmul.f32 %v1179, %v1179
        %v1253 = vmul.f32 %v1208, %v1208
        %v1254 = vadd.f32 %v1238, %v1240
        %v1255 = vadd.f32 %v1254, %v1242
        %v1256 = vadd.f32 %v1255, %v1244
        %v1257 = vadd.f32 %v1256, %v1246
        %v1258 = vadd.f32 %v1257, %v1248
        %v1259 = vadd.f32 %v1258, %v1250
        %v1260 = vadd.f32 %v1259, %v1252
        %v1261 = vrot.slane %v1260, 4
        %v1262 = vadd.f32 %v1260, %v1261
        %v1263 = vrot.slane %v1262, 2
        %v1264 = vadd.f32 %v1262, %v1263
        %v1265 = vrot.slane %v1264, 1
        %v1266 = vadd.f32 %v1264, %v1265
        %v1267 = vadd.f32 %v1239, %v1241
        %v1268 = vadd.f32 %v1267, %v1243
        %v1269 = vadd.f32 %v1268, %v1245
        %v1270 = vadd.f32 %v1269, %v1247
        %v1271 = vadd.f32 %v1270, %v1249
        %v1272 = vadd.f32 %v1271, %v1251
        %v1273 = vadd.f32 %v1272, %v1253
        %v1274 = vrot.slane %v1273, 4
        %v1275 = vadd.f32 %v1273, %v1274
        %v1276 = vrot.slane %v1275, 2
        %v1277 = vadd.f32 %v1275, %v1276
        %v1278 = vrot.slane %v1277, 1
        %v1279 = vadd.f32 %v1277, %v1278
        %v1280 = vmul.f32 %v1266, %v854
        %v1281 = vmul.f32 %v1279, %v854
        %v1282 = vmul.f32 %v1236, %v1236
        %v1283 = vmul.f32 %v1237, %v1237
        %v1284 = vsub.f32 %v1280, %v1282
        %v1285 = vsub.f32 %v1281, %v1283
        %v1286 = vadd.f32 %v1284, 1e-05
        %v1287 = vadd.f32 %v1285, 1e-05
        %v1288 = vrsqrt.pop %v1286
        %v1289 = vmul.f32 %v1288, %v1286
        %v1290 = vmul.f32 %v1289, %v1288
        %v1291 = vmul.f32 0.5, %v1290
        %v1292 = vsub.f32 1.5, %v1291
        %v1293 = vmul.f32 %v1288, %v1292
        %vm1294 = vweird.f32 %v1286
        %vm1295 = vweird.f32 %v1288
        %vm1296 = vmor %vm1294, %vm1295
        %v1297 = vsel %vm1296, %v1288, %v1293
        %v1298 = vrsqrt.pop %v1287
        %v1299 = vmul.f32 %v1298, %v1287
        %v1300 = vmul.f32 %v1299, %v1298
        %v1301 = vmul.f32 0.5, %v1300
        %v1302 = vsub.f32 1.5, %v1301
        %v1303 = vmul.f32 %v1298, %v1302
        %vm1304 = vweird.f32 %v1287
        %vm1305 = vweird.f32 %v1298
        %vm1306 = vmor %vm1304, %vm1305
        %v1307 = vsel %vm1306, %v1298, %v1303
        %v1308 = vsub.f32 %v1162, %v1236
        %v1309 = vsub.f32 %v1191, %v1237
        %v1310 = vsub.f32 %v1164, %v1236
        %v1311 = vsub.f32 %v1193, %v1237
        %v1312 = vsub.f32 %v1167, %v1236
        %v1313 = vsub.f32 %v1196, %v1237
        %v1314 = vsub.f32 %v1169, %v1236
        %v1315 = vsub.f32 %v1198, %v1237
        %v1316 = vsub.f32 %v1172, %v1236
        %v1317 = vsub.f32 %v1201, %v1237
        %v1318 = vsub.f32 %v1174, %v1236
        %v1319 = vsub.f32 %v1203, %v1237
        %v1320 = vsub.f32 %v1177, %v1236
        %v1321 = vsub.f32 %v1206, %v1237
        %v1322 = vsub.f32 %v1179, %v1236
        %v1323 = vsub.f32 %v1208, %v1237
        %v1324 = vmul.f32 %v1308, %v1297
        %v1325 = vmul.f32 %v1309, %v1307
        %v1326 = vmul.f32 %v1310, %v1297
        %v1327 = vmul.f32 %v1311, %v1307
        %v1328 = vmul.f32 %v1312, %v1297
        %v1329 = vmul.f32 %v1313, %v1307
        %v1330 = vmul.f32 %v1314, %v1297
        %v1331 = vmul.f32 %v1315, %v1307
        %v1332 = vmul.f32 %v1316, %v1297
        %v1333 = vmul.f32 %v1317, %v1307
        %v1334 = vmul.f32 %v1318, %v1297
        %v1335 = vmul.f32 %v1319, %v1307
        %v1336 = vmul.f32 %v1320, %v1297
        %v1337 = vmul.f32 %v1321, %v1307
        %v1338 = vmul.f32 %v1322, %v1297
        %v1339 = vmul.f32 %v1323, %v1307
        %1340 = vset.pattern.permute.xlu0 4
        %1341 = vperm.xlu0 %1340, %v559
        %v1342 = vpop.permute.xlu0 %1341
        %1344 = vset.pattern.permute.xlu0 4
        %1345 = vperm.xlu0 %1344, %v560
        %v1346 = vpop.permute.xlu0 %1345
        %1348 = vset.pattern.permute.xlu0 4
        %1349 = vperm.xlu0 %1348, %v561
        %v1350 = vpop.permute.xlu0 %1349
        %1352 = vset.pattern.permute.xlu0 4
        %1353 = vperm.xlu0 %1352, %v562
        %v1354 = vpop.permute.xlu0 %1353
        %1356 = vset.pattern.permute.xlu0 4
        %1357 = vperm.xlu0 %1356, %v563
        %v1358 = vpop.permute.xlu0 %1357
        %1360 = vset.pattern.permute.xlu0 4
        %1361 = vperm.xlu0 %1360, %v564
        %v1362 = vpop.permute.xlu0 %1361
        %1364 = vset.pattern.permute.xlu0 4
        %1365 = vperm.xlu0 %1364, %v565
        %v1366 = vpop.permute.xlu0 %1365
        %1368 = vset.pattern.permute.xlu0 4
        %1369 = vperm.xlu0 %1368, %v566
        %v1370 = vpop.permute.xlu0 %1369
        %v1372 = vmul.f32 %v1324, %v1342
        %v1373 = vmul.f32 %v1325, %v1342
        %v1374 = vmul.f32 %v1326, %v1346
        %v1375 = vmul.f32 %v1327, %v1346
        %v1376 = vmul.f32 %v1328, %v1350
        %v1377 = vmul.f32 %v1329, %v1350
        %v1378 = vmul.f32 %v1330, %v1354
        %v1379 = vmul.f32 %v1331, %v1354
        %v1380 = vmul.f32 %v1332, %v1358
        %v1381 = vmul.f32 %v1333, %v1358
        %v1382 = vmul.f32 %v1334, %v1362
        %v1383 = vmul.f32 %v1335, %v1362
        %v1384 = vmul.f32 %v1336, %v1366
        %v1385 = vmul.f32 %v1337, %v1366
        %v1386 = vmul.f32 %v1338, %v1370
        %v1387 = vmul.f32 %v1339, %v1370
        %1388 = vset.pattern.permute.xlu0 5
        %1389 = vperm.xlu0 %1388, %v559
        %v1390 = vpop.permute.xlu0 %1389
        %1392 = vset.pattern.permute.xlu0 5
        %1393 = vperm.xlu0 %1392, %v560
        %v1394 = vpop.permute.xlu0 %1393
        %1396 = vset.pattern.permute.xlu0 5
        %1397 = vperm.xlu0 %1396, %v561
        %v1398 = vpop.permute.xlu0 %1397
        %1400 = vset.pattern.permute.xlu0 5
        %1401 = vperm.xlu0 %1400, %v562
        %v1402 = vpop.permute.xlu0 %1401
        %1404 = vset.pattern.permute.xlu0 5
        %1405 = vperm.xlu0 %1404, %v563
        %v1406 = vpop.permute.xlu0 %1405
        %1408 = vset.pattern.permute.xlu0 5
        %1409 = vperm.xlu0 %1408, %v564
        %v1410 = vpop.permute.xlu0 %1409
        %1412 = vset.pattern.permute.xlu0 5
        %1413 = vperm.xlu0 %1412, %v565
        %v1414 = vpop.permute.xlu0 %1413
        %1416 = vset.pattern.permute.xlu0 5
        %1417 = vperm.xlu0 %1416, %v566
        %v1418 = vpop.permute.xlu0 %1417
        %v1420 = vadd.f32 %v1372, %v1390
        %v1421 = vadd.f32 %v1373, %v1390
        %v1422 = vadd.f32 %v1374, %v1394
        %v1423 = vadd.f32 %v1375, %v1394
        %v1424 = vadd.f32 %v1376, %v1398
        %v1425 = vadd.f32 %v1377, %v1398
        %v1426 = vadd.f32 %v1378, %v1402
        %v1427 = vadd.f32 %v1379, %v1402
        %v1428 = vadd.f32 %v1380, %v1406
        %v1429 = vadd.f32 %v1381, %v1406
        %v1430 = vadd.f32 %v1382, %v1410
        %v1431 = vadd.f32 %v1383, %v1410
        %v1432 = vadd.f32 %v1384, %v1414
        %v1433 = vadd.f32 %v1385, %v1414
        %v1434 = vadd.f32 %v1386, %v1418
        %v1435 = vadd.f32 %v1387, %v1418
        %v1436 = vmax.f32 %v1420, 0.0
        %v1437 = vmax.f32 %v1421, 0.0
        %v1438 = vmax.f32 %v1422, 0.0
        %v1439 = vmax.f32 %v1423, 0.0
        %v1440 = vmax.f32 %v1424, 0.0
        %v1441 = vmax.f32 %v1425, 0.0
        %v1442 = vmax.f32 %v1426, 0.0
        %v1443 = vmax.f32 %v1427, 0.0
        %v1444 = vmax.f32 %v1428, 0.0
        %v1445 = vmax.f32 %v1429, 0.0
        %v1446 = vmax.f32 %v1430, 0.0
        %v1447 = vmax.f32 %v1431, 0.0
        %v1448 = vmax.f32 %v1432, 0.0
        %v1449 = vmax.f32 %v1433, 0.0
        %v1450 = vmax.f32 %v1434, 0.0
        %v1451 = vmax.f32 %v1435, 0.0
        %v1452 = vpack.c.bf16 %v1438, %v1436
        %v1453 = vpack.c.bf16 %v1439, %v1437
        %v1454 = vpack.c.bf16 %v1442, %v1440
        %v1455 = vpack.c.bf16 %v1443, %v1441
        %v1456 = vpack.c.bf16 %v1446, %v1444
        %v1457 = vpack.c.bf16 %v1447, %v1445
        %v1458 = vpack.c.bf16 %v1450, %v1448
        %v1459 = vpack.c.bf16 %v1451, %v1449
        %v1460 = vld [vmem:[%s3] sm:$0xf]
        %v1461 = vld [vmem:[%s3 + $0x4] sm:$0xf]
        %v1462 = vld [vmem:[%s3 + $0x8] sm:$0xf]
        %v1463 = vld [vmem:[%s3 + $0xc] sm:$0xf]
        %1464 = vset.pattern.permute.xlu0 6
        %1465 = vperm.xlu0 %1464, %v559
        %v1466 = vpop.permute.xlu0 %1465
        %1468 = vset.pattern.permute.xlu0 6
        %1469 = vperm.xlu0 %1468, %v560
        %v1470 = vpop.permute.xlu0 %1469
        %1472 = vset.pattern.permute.xlu0 6
        %1473 = vperm.xlu0 %1472, %v561
        %v1474 = vpop.permute.xlu0 %1473
        %1476 = vset.pattern.permute.xlu0 6
        %1477 = vperm.xlu0 %1476, %v562
        %v1478 = vpop.permute.xlu0 %1477
        %v1484 = vunpack.c.l.b16 %v1460
        %v1485 = vunpack.c.l.b16 %v1461
        %v1486 = vunpack.c.l.b16 %v1462
        %v1487 = vunpack.c.l.b16 %v1463
        %v1488 = vpack.c.b16 %v1485, %v1484
        %v1489 = vpack.c.b16 %v1487, %v1486
        %v1491 = vsel %vm1139, %v1488, 0
        %v1494 = vsel %vm1139, %v1489, 0
        %1496 = vmatpush.bf16.msra.mxu0 0
        %1497 = vmatpush.bf16.msra.mxu0 0
        %1498 = vmatpush.bf16.msra.mxu0 0
        %1499 = vmatpush.bf16.msra.mxu0 0
        %1500 = vmatpush.bf16.msra.mxu0 %v1458
        %1501 = vmatpush.bf16.msra.mxu0 %v1456
        %1502 = vmatpush.bf16.msra.mxu0 %v1454
        %1503 = vmatpush.bf16.msra.mxu0 %v1452
        %1504 = vmatmul.bf16.gmra.mxu0 %v1491
        %v1505 = vpop.f32.mrf.mxu0
        %v1506 = vadd.f32 %v1466, %v1505
        %v1507 = vpop.f32.mrf.mxu0
        %v1508 = vadd.f32 %v1470, %v1507
        %1509 = vmatmul.bf16.gmra.mxu0 %v1494
        %v1510 = vpop.f32.mrf.mxu0
        %v1511 = vadd.f32 %v1474, %v1510
        %v1512 = vpop.f32.mrf.mxu0
        %v1513 = vadd.f32 %v1478, %v1512
        %1514 = vdwg.mxu0
        %1515 = vmatpush.bf16.msra.mxu0 0
        %1516 = vmatpush.bf16.msra.mxu0 0
        %1517 = vmatpush.bf16.msra.mxu0 0
        %1518 = vmatpush.bf16.msra.mxu0 0
        %1519 = vmatpush.bf16.msra.mxu0 %v1459
        %1520 = vmatpush.bf16.msra.mxu0 %v1457
        %1521 = vmatpush.bf16.msra.mxu0 %v1455
        %1522 = vmatpush.bf16.msra.mxu0 %v1453
        %1523 = vmatmul.bf16.gmra.mxu0 %v1491
        %v1524 = vpop.f32.mrf.mxu0
        %v1525 = vadd.f32 %v1466, %v1524
        %v1526 = vpop.f32.mrf.mxu0
        %v1527 = vadd.f32 %v1470, %v1526
        %1528 = vmatmul.bf16.gmra.mxu0 %v1494
        %v1529 = vpop.f32.mrf.mxu0
        %v1530 = vadd.f32 %v1474, %v1529
        %v1531 = vpop.f32.mrf.mxu0
        %v1532 = vadd.f32 %v1478, %v1531
        %1533 = vdwg.mxu0
        %v1534 = vadd.f32 %v1506, %v1508
        %v1535 = vadd.f32 %v1534, %v1511
        %v1536 = vadd.f32 %v1535, %v1513
        %v1537 = vrot.slane %v1536, 4
        %v1538 = vadd.f32 %v1536, %v1537
        %v1539 = vrot.slane %v1538, 2
        %v1540 = vadd.f32 %v1538, %v1539
        %v1541 = vrot.slane %v1540, 1
        %v1542 = vadd.f32 %v1540, %v1541
        %v1543 = vadd.f32 %v1525, %v1527
        %v1544 = vadd.f32 %v1543, %v1530
        %v1545 = vadd.f32 %v1544, %v1532
        %v1546 = vrot.slane %v1545, 4
        %v1547 = vadd.f32 %v1545, %v1546
        %v1548 = vrot.slane %v1547, 2
        %v1549 = vadd.f32 %v1547, %v1548
        %v1550 = vrot.slane %v1549, 1
        %v1551 = vadd.f32 %v1549, %v1550
        %v1552 = vrcp.pop 32.0
        %v1553 = vmul.f32 32.0, %v1552
        %v1554 = vsub.f32 1.0, %v1553
        %v1555 = vmul.f32 %v1552, %v1554
        %v1556 = vadd.f32 %v1552, %v1555
        %vm1557 = vweird.f32 %v1552
        %v1558 = vsel %vm1557, %v1552, %v1556
        %v1559 = vmul.f32 %v1542, %v1558
        %v1560 = vmul.f32 %v1551, %v1558
        %v1561 = vmul.f32 %v1506, %v1506
        %v1562 = vmul.f32 %v1525, %v1525
        %v1563 = vmul.f32 %v1508, %v1508
        %v1564 = vmul.f32 %v1527, %v1527
        %v1565 = vmul.f32 %v1511, %v1511
        %v1566 = vmul.f32 %v1530, %v1530
        %v1567 = vmul.f32 %v1513, %v1513
        %v1568 = vmul.f32 %v1532, %v1532
        %v1569 = vadd.f32 %v1561, %v1563
        %v1570 = vadd.f32 %v1569, %v1565
        %v1571 = vadd.f32 %v1570, %v1567
        %v1572 = vrot.slane %v1571, 4
        %v1573 = vadd.f32 %v1571, %v1572
        %v1574 = vrot.slane %v1573, 2
        %v1575 = vadd.f32 %v1573, %v1574
        %v1576 = vrot.slane %v1575, 1
        %v1577 = vadd.f32 %v1575, %v1576
        %v1578 = vadd.f32 %v1562, %v1564
        %v1579 = vadd.f32 %v1578, %v1566
        %v1580 = vadd.f32 %v1579, %v1568
        %v1581 = vrot.slane %v1580, 4
        %v1582 = vadd.f32 %v1580, %v1581
        %v1583 = vrot.slane %v1582, 2
        %v1584 = vadd.f32 %v1582, %v1583
        %v1585 = vrot.slane %v1584, 1
        %v1586 = vadd.f32 %v1584, %v1585
        %v1587 = vmul.f32 %v1577, %v1558
        %v1588 = vmul.f32 %v1586, %v1558
        %v1589 = vmul.f32 %v1559, %v1559
        %v1590 = vmul.f32 %v1560, %v1560
        %v1591 = vsub.f32 %v1587, %v1589
        %v1592 = vsub.f32 %v1588, %v1590
        %v1593 = vadd.f32 %v1591, 1e-05
        %v1594 = vadd.f32 %v1592, 1e-05
        %v1595 = vrsqrt.pop %v1593
        %v1596 = vmul.f32 %v1595, %v1593
        %v1597 = vmul.f32 %v1596, %v1595
        %v1598 = vmul.f32 0.5, %v1597
        %v1599 = vsub.f32 1.5, %v1598
        %v1600 = vmul.f32 %v1595, %v1599
        %vm1601 = vweird.f32 %v1593
        %vm1602 = vweird.f32 %v1595
        %vm1603 = vmor %vm1601, %vm1602
        %v1604 = vsel %vm1603, %v1595, %v1600
        %v1605 = vrsqrt.pop %v1594
        %v1606 = vmul.f32 %v1605, %v1594
        %v1607 = vmul.f32 %v1606, %v1605
        %v1608 = vmul.f32 0.5, %v1607
        %v1609 = vsub.f32 1.5, %v1608
        %v1610 = vmul.f32 %v1605, %v1609
        %vm1611 = vweird.f32 %v1594
        %vm1612 = vweird.f32 %v1605
        %vm1613 = vmor %vm1611, %vm1612
        %v1614 = vsel %vm1613, %v1605, %v1610
        %v1615 = vsub.f32 %v1506, %v1559
        %v1616 = vsub.f32 %v1525, %v1560
        %v1617 = vsub.f32 %v1508, %v1559
        %v1618 = vsub.f32 %v1527, %v1560
        %v1619 = vsub.f32 %v1511, %v1559
        %v1620 = vsub.f32 %v1530, %v1560
        %v1621 = vsub.f32 %v1513, %v1559
        %v1622 = vsub.f32 %v1532, %v1560
        %v1623 = vmul.f32 %v1615, %v1604
        %v1624 = vmul.f32 %v1616, %v1614
        %v1625 = vmul.f32 %v1617, %v1604
        %v1626 = vmul.f32 %v1618, %v1614
        %v1627 = vmul.f32 %v1619, %v1604
        %v1628 = vmul.f32 %v1620, %v1614
        %v1629 = vmul.f32 %v1621, %v1604
        %v1630 = vmul.f32 %v1622, %v1614
        %1631 = vset.pattern.permute.xlu0 7
        %1632 = vperm.xlu0 %1631, %v559
        %v1633 = vpop.permute.xlu0 %1632
        %1635 = vset.pattern.permute.xlu0 7
        %1636 = vperm.xlu0 %1635, %v560
        %v1637 = vpop.permute.xlu0 %1636
        %1639 = vset.pattern.permute.xlu0 7
        %1640 = vperm.xlu0 %1639, %v561
        %v1641 = vpop.permute.xlu0 %1640
        %1643 = vset.pattern.permute.xlu0 7
        %1644 = vperm.xlu0 %1643, %v562
        %v1645 = vpop.permute.xlu0 %1644
        %v1647 = vmul.f32 %v1623, %v1633
        %v1648 = vmul.f32 %v1624, %v1633
        %v1649 = vmul.f32 %v1625, %v1637
        %v1650 = vmul.f32 %v1626, %v1637
        %v1651 = vmul.f32 %v1627, %v1641
        %v1652 = vmul.f32 %v1628, %v1641
        %v1653 = vmul.f32 %v1629, %v1645
        %v1654 = vmul.f32 %v1630, %v1645
        %1655 = vset.pattern.permute.xlu0 8
        %1656 = vperm.xlu0 %1655, %v559
        %v1657 = vpop.permute.xlu0 %1656
        %1659 = vset.pattern.permute.xlu0 8
        %1660 = vperm.xlu0 %1659, %v560
        %v1661 = vpop.permute.xlu0 %1660
        %1663 = vset.pattern.permute.xlu0 8
        %1664 = vperm.xlu0 %1663, %v561
        %v1665 = vpop.permute.xlu0 %1664
        %1667 = vset.pattern.permute.xlu0 8
        %1668 = vperm.xlu0 %1667, %v562
        %v1669 = vpop.permute.xlu0 %1668
        %v1671 = vadd.f32 %v1647, %v1657
        %v1672 = vadd.f32 %v1648, %v1657
        %v1673 = vadd.f32 %v1649, %v1661
        %v1674 = vadd.f32 %v1650, %v1661
        %v1675 = vadd.f32 %v1651, %v1665
        %v1676 = vadd.f32 %v1652, %v1665
        %v1677 = vadd.f32 %v1653, %v1669
        %v1678 = vadd.f32 %v1654, %v1669
        %v1679 = vmax.f32 %v1671, 0.0
        %v1680 = vmax.f32 %v1672, 0.0
        %v1681 = vmax.f32 %v1673, 0.0
        %v1682 = vmax.f32 %v1674, 0.0
        %v1683 = vmax.f32 %v1675, 0.0
        %v1684 = vmax.f32 %v1676, 0.0
        %v1685 = vmax.f32 %v1677, 0.0
        %v1686 = vmax.f32 %v1678, 0.0
        %v1687 = vpack.c.bf16 %v1681, %v1679
        %v1688 = vpack.c.bf16 %v1682, %v1680
        %v1689 = vpack.c.bf16 %v1685, %v1683
        %v1690 = vpack.c.bf16 %v1686, %v1684
        %v1691 = vld [vmem:[%s4] sm:$0xf]
        %v1692 = vld [vmem:[%s4 + $0x4] sm:$0xf]
        %v1693 = vld [vmem:[%s4 + $0x8] sm:$0xf]
        %v1694 = vld [vmem:[%s4 + $0xc] sm:$0xf]
        %v1695 = vld [vmem:[%s4 + $0x10] sm:$0xf]
        %v1696 = vld [vmem:[%s4 + $0x14] sm:$0xf]
        %v1697 = vld [vmem:[%s4 + $0x18] sm:$0xf]
        %v1698 = vld [vmem:[%s4 + $0x1c] sm:$0xf]
        %v1707 = vunpack.c.l.b16 %v1691
        %v1708 = vunpack.c.l.b16 %v1692
        %v1709 = vunpack.c.l.b16 %v1693
        %v1710 = vunpack.c.l.b16 %v1694
        %v1711 = vunpack.c.l.b16 %v1695
        %v1712 = vunpack.c.l.b16 %v1696
        %v1713 = vunpack.c.l.b16 %v1697
        %v1714 = vunpack.c.l.b16 %v1698
        %v1715 = vpack.c.b16 %v1708, %v1707
        %v1716 = vpack.c.b16 %v1710, %v1709
        %v1717 = vpack.c.b16 %v1712, %v1711
        %v1718 = vpack.c.b16 %v1714, %v1713
        %v1720 = vsel %vm643, %v1715, 0
        %v1723 = vsel %vm643, %v1716, 0
        %v1726 = vsel %vm643, %v1717, 0
        %v1729 = vsel %vm643, %v1718, 0
        %1731 = vmatpush.bf16.msra.mxu0 0
        %1732 = vmatpush.bf16.msra.mxu0 0
        %1733 = vmatpush.bf16.msra.mxu0 0
        %1734 = vmatpush.bf16.msra.mxu0 0
        %1735 = vmatpush.bf16.msra.mxu0 0
        %1736 = vmatpush.bf16.msra.mxu0 0
        %1737 = vmatpush.bf16.msra.mxu0 %v1689
        %1738 = vmatpush.bf16.msra.mxu0 %v1687
        %1739 = vmatmul.bf16.gmra.mxu0 %v1720
        %v1740 = vpop.f32.mrf.mxu0
        %v1741 = vadd.f32 %v698, %v1740
        %v1742 = vpop.f32.mrf.mxu0
        %v1743 = vadd.f32 %v700, %v1742
        %1744 = vmatmul.bf16.gmra.mxu0 %v1723
        %v1745 = vpop.f32.mrf.mxu0
        %v1746 = vadd.f32 %v703, %v1745
        %v1747 = vpop.f32.mrf.mxu0
        %v1748 = vadd.f32 %v705, %v1747
        %1749 = vmatmul.bf16.gmra.mxu0 %v1726
        %v1750 = vpop.f32.mrf.mxu0
        %v1751 = vadd.f32 %v708, %v1750
        %v1752 = vpop.f32.mrf.mxu0
        %v1753 = vadd.f32 %v710, %v1752
        %1754 = vmatmul.bf16.gmra.mxu0 %v1729
        %v1755 = vpop.f32.mrf.mxu0
        %v1756 = vadd.f32 %v713, %v1755
        %v1757 = vpop.f32.mrf.mxu0
        %v1758 = vadd.f32 %v715, %v1757
        %1759 = vdwg.mxu0
        %1760 = vmatpush.bf16.msra.mxu0 0
        %1761 = vmatpush.bf16.msra.mxu0 0
        %1762 = vmatpush.bf16.msra.mxu0 0
        %1763 = vmatpush.bf16.msra.mxu0 0
        %1764 = vmatpush.bf16.msra.mxu0 0
        %1765 = vmatpush.bf16.msra.mxu0 0
        %1766 = vmatpush.bf16.msra.mxu0 %v1690
        %1767 = vmatpush.bf16.msra.mxu0 %v1688
        %1768 = vmatmul.bf16.gmra.mxu0 %v1720
        %v1769 = vpop.f32.mrf.mxu0
        %v1770 = vadd.f32 %v747, %v1769
        %v1771 = vpop.f32.mrf.mxu0
        %v1772 = vadd.f32 %v749, %v1771
        %1773 = vmatmul.bf16.gmra.mxu0 %v1723
        %v1774 = vpop.f32.mrf.mxu0
        %v1775 = vadd.f32 %v752, %v1774
        %v1776 = vpop.f32.mrf.mxu0
        %v1777 = vadd.f32 %v754, %v1776
        %1778 = vmatmul.bf16.gmra.mxu0 %v1726
        %v1779 = vpop.f32.mrf.mxu0
        %v1780 = vadd.f32 %v757, %v1779
        %v1781 = vpop.f32.mrf.mxu0
        %v1782 = vadd.f32 %v759, %v1781
        %1783 = vmatmul.bf16.gmra.mxu0 %v1729
        %v1784 = vpop.f32.mrf.mxu0
        %v1785 = vadd.f32 %v762, %v1784
        %v1786 = vpop.f32.mrf.mxu0
        %v1787 = vadd.f32 %v764, %v1786
        %1788 = vdwg.mxu0
        %1789 = vset.pattern.permute.xlu0 9
        %1790 = vperm.xlu0 %1789, %v559
        %v1791 = vpop.permute.xlu0 %1790
        %1793 = vset.pattern.permute.xlu0 9
        %1794 = vperm.xlu0 %1793, %v560
        %v1795 = vpop.permute.xlu0 %1794
        %1797 = vset.pattern.permute.xlu0 9
        %1798 = vperm.xlu0 %1797, %v561
        %v1799 = vpop.permute.xlu0 %1798
        %1801 = vset.pattern.permute.xlu0 9
        %1802 = vperm.xlu0 %1801, %v562
        %v1803 = vpop.permute.xlu0 %1802
        %1805 = vset.pattern.permute.xlu0 9
        %1806 = vperm.xlu0 %1805, %v563
        %v1807 = vpop.permute.xlu0 %1806
        %1809 = vset.pattern.permute.xlu0 9
        %1810 = vperm.xlu0 %1809, %v564
        %v1811 = vpop.permute.xlu0 %1810
        %1813 = vset.pattern.permute.xlu0 9
        %1814 = vperm.xlu0 %1813, %v565
        %v1815 = vpop.permute.xlu0 %1814
        %1817 = vset.pattern.permute.xlu0 9
        %1818 = vperm.xlu0 %1817, %v566
        %v1819 = vpop.permute.xlu0 %1818
        %v1821 = vadd.f32 %v1741, %v1791
        %v1822 = vadd.f32 %v1770, %v1791
        %v1823 = vadd.f32 %v1743, %v1795
        %v1824 = vadd.f32 %v1772, %v1795
        %v1825 = vadd.f32 %v1746, %v1799
        %v1826 = vadd.f32 %v1775, %v1799
        %v1827 = vadd.f32 %v1748, %v1803
        %v1828 = vadd.f32 %v1777, %v1803
        %v1829 = vadd.f32 %v1751, %v1807
        %v1830 = vadd.f32 %v1780, %v1807
        %v1831 = vadd.f32 %v1753, %v1811
        %v1832 = vadd.f32 %v1782, %v1811
        %v1833 = vadd.f32 %v1756, %v1815
        %v1834 = vadd.f32 %v1785, %v1815
        %v1835 = vadd.f32 %v1758, %v1819
        %v1836 = vadd.f32 %v1787, %v1819
        %v1837 = vadd.f32 %v1821, %v1823
        %v1838 = vadd.f32 %v1837, %v1825
        %v1839 = vadd.f32 %v1838, %v1827
        %v1840 = vadd.f32 %v1839, %v1829
        %v1841 = vadd.f32 %v1840, %v1831
        %v1842 = vadd.f32 %v1841, %v1833
        %v1843 = vadd.f32 %v1842, %v1835
        %v1844 = vrot.slane %v1843, 4
        %v1845 = vadd.f32 %v1843, %v1844
        %v1846 = vrot.slane %v1845, 2
        %v1847 = vadd.f32 %v1845, %v1846
        %v1848 = vrot.slane %v1847, 1
        %v1849 = vadd.f32 %v1847, %v1848
        %v1850 = vadd.f32 %v1822, %v1824
        %v1851 = vadd.f32 %v1850, %v1826
        %v1852 = vadd.f32 %v1851, %v1828
        %v1853 = vadd.f32 %v1852, %v1830
        %v1854 = vadd.f32 %v1853, %v1832
        %v1855 = vadd.f32 %v1854, %v1834
        %v1856 = vadd.f32 %v1855, %v1836
        %v1857 = vrot.slane %v1856, 4
        %v1858 = vadd.f32 %v1856, %v1857
        %v1859 = vrot.slane %v1858, 2
        %v1860 = vadd.f32 %v1858, %v1859
        %v1861 = vrot.slane %v1860, 1
        %v1862 = vadd.f32 %v1860, %v1861
        %v1863 = vmul.f32 %v1849, %v854
        %v1864 = vmul.f32 %v1862, %v854
        %v1865 = vmul.f32 %v1821, %v1821
        %v1866 = vmul.f32 %v1822, %v1822
        %v1867 = vmul.f32 %v1823, %v1823
        %v1868 = vmul.f32 %v1824, %v1824
        %v1869 = vmul.f32 %v1825, %v1825
        %v1870 = vmul.f32 %v1826, %v1826
        %v1871 = vmul.f32 %v1827, %v1827
        %v1872 = vmul.f32 %v1828, %v1828
        %v1873 = vmul.f32 %v1829, %v1829
        %v1874 = vmul.f32 %v1830, %v1830
        %v1875 = vmul.f32 %v1831, %v1831
        %v1876 = vmul.f32 %v1832, %v1832
        %v1877 = vmul.f32 %v1833, %v1833
        %v1878 = vmul.f32 %v1834, %v1834
        %v1879 = vmul.f32 %v1835, %v1835
        %v1880 = vmul.f32 %v1836, %v1836
        %v1881 = vadd.f32 %v1865, %v1867
        %v1882 = vadd.f32 %v1881, %v1869
        %v1883 = vadd.f32 %v1882, %v1871
        %v1884 = vadd.f32 %v1883, %v1873
        %v1885 = vadd.f32 %v1884, %v1875
        %v1886 = vadd.f32 %v1885, %v1877
        %v1887 = vadd.f32 %v1886, %v1879
        %v1888 = vrot.slane %v1887, 4
        %v1889 = vadd.f32 %v1887, %v1888
        %v1890 = vrot.slane %v1889, 2
        %v1891 = vadd.f32 %v1889, %v1890
        %v1892 = vrot.slane %v1891, 1
        %v1893 = vadd.f32 %v1891, %v1892
        %v1894 = vadd.f32 %v1866, %v1868
        %v1895 = vadd.f32 %v1894, %v1870
        %v1896 = vadd.f32 %v1895, %v1872
        %v1897 = vadd.f32 %v1896, %v1874
        %v1898 = vadd.f32 %v1897, %v1876
        %v1899 = vadd.f32 %v1898, %v1878
        %v1900 = vadd.f32 %v1899, %v1880
        %v1901 = vrot.slane %v1900, 4
        %v1902 = vadd.f32 %v1900, %v1901
        %v1903 = vrot.slane %v1902, 2
        %v1904 = vadd.f32 %v1902, %v1903
        %v1905 = vrot.slane %v1904, 1
        %v1906 = vadd.f32 %v1904, %v1905
        %v1907 = vmul.f32 %v1893, %v854
        %v1908 = vmul.f32 %v1906, %v854
        %v1909 = vmul.f32 %v1863, %v1863
        %v1910 = vmul.f32 %v1864, %v1864
        %v1911 = vsub.f32 %v1907, %v1909
        %v1912 = vsub.f32 %v1908, %v1910
        %v1913 = vadd.f32 %v1911, 1e-05
        %v1914 = vadd.f32 %v1912, 1e-05
        %v1915 = vrsqrt.pop %v1913
        %v1916 = vmul.f32 %v1915, %v1913
        %v1917 = vmul.f32 %v1916, %v1915
        %v1918 = vmul.f32 0.5, %v1917
        %v1919 = vsub.f32 1.5, %v1918
        %v1920 = vmul.f32 %v1915, %v1919
        %vm1921 = vweird.f32 %v1913
        %vm1922 = vweird.f32 %v1915
        %vm1923 = vmor %vm1921, %vm1922
        %v1924 = vsel %vm1923, %v1915, %v1920
        %v1925 = vrsqrt.pop %v1914
        %v1926 = vmul.f32 %v1925, %v1914
        %v1927 = vmul.f32 %v1926, %v1925
        %v1928 = vmul.f32 0.5, %v1927
        %v1929 = vsub.f32 1.5, %v1928
        %v1930 = vmul.f32 %v1925, %v1929
        %vm1931 = vweird.f32 %v1914
        %vm1932 = vweird.f32 %v1925
        %vm1933 = vmor %vm1931, %vm1932
        %v1934 = vsel %vm1933, %v1925, %v1930
        %v1935 = vsub.f32 %v1821, %v1863
        %v1936 = vsub.f32 %v1822, %v1864
        %v1937 = vsub.f32 %v1823, %v1863
        %v1938 = vsub.f32 %v1824, %v1864
        %v1939 = vsub.f32 %v1825, %v1863
        %v1940 = vsub.f32 %v1826, %v1864
        %v1941 = vsub.f32 %v1827, %v1863
        %v1942 = vsub.f32 %v1828, %v1864
        %v1943 = vsub.f32 %v1829, %v1863
        %v1944 = vsub.f32 %v1830, %v1864
        %v1945 = vsub.f32 %v1831, %v1863
        %v1946 = vsub.f32 %v1832, %v1864
        %v1947 = vsub.f32 %v1833, %v1863
        %v1948 = vsub.f32 %v1834, %v1864
        %v1949 = vsub.f32 %v1835, %v1863
        %v1950 = vsub.f32 %v1836, %v1864
        %v1951 = vmul.f32 %v1935, %v1924
        %v1952 = vmul.f32 %v1936, %v1934
        %v1953 = vmul.f32 %v1937, %v1924
        %v1954 = vmul.f32 %v1938, %v1934
        %v1955 = vmul.f32 %v1939, %v1924
        %v1956 = vmul.f32 %v1940, %v1934
        %v1957 = vmul.f32 %v1941, %v1924
        %v1958 = vmul.f32 %v1942, %v1934
        %v1959 = vmul.f32 %v1943, %v1924
        %v1960 = vmul.f32 %v1944, %v1934
        %v1961 = vmul.f32 %v1945, %v1924
        %v1962 = vmul.f32 %v1946, %v1934
        %v1963 = vmul.f32 %v1947, %v1924
        %v1964 = vmul.f32 %v1948, %v1934
        %v1965 = vmul.f32 %v1949, %v1924
        %v1966 = vmul.f32 %v1950, %v1934
        %1967 = vset.pattern.permute.xlu0 10
        %1968 = vperm.xlu0 %1967, %v559
        %v1969 = vpop.permute.xlu0 %1968
        %1971 = vset.pattern.permute.xlu0 10
        %1972 = vperm.xlu0 %1971, %v560
        %v1973 = vpop.permute.xlu0 %1972
        %1975 = vset.pattern.permute.xlu0 10
        %1976 = vperm.xlu0 %1975, %v561
        %v1977 = vpop.permute.xlu0 %1976
        %1979 = vset.pattern.permute.xlu0 10
        %1980 = vperm.xlu0 %1979, %v562
        %v1981 = vpop.permute.xlu0 %1980
        %1983 = vset.pattern.permute.xlu0 10
        %1984 = vperm.xlu0 %1983, %v563
        %v1985 = vpop.permute.xlu0 %1984
        %1987 = vset.pattern.permute.xlu0 10
        %1988 = vperm.xlu0 %1987, %v564
        %v1989 = vpop.permute.xlu0 %1988
        %1991 = vset.pattern.permute.xlu0 10
        %1992 = vperm.xlu0 %1991, %v565
        %v1993 = vpop.permute.xlu0 %1992
        %1995 = vset.pattern.permute.xlu0 10
        %1996 = vperm.xlu0 %1995, %v566
        %v1997 = vpop.permute.xlu0 %1996
        %v1999 = vmul.f32 %v1951, %v1969
        %v2000 = vmul.f32 %v1952, %v1969
        %v2001 = vmul.f32 %v1953, %v1973
        %v2002 = vmul.f32 %v1954, %v1973
        %v2003 = vmul.f32 %v1955, %v1977
        %v2004 = vmul.f32 %v1956, %v1977
        %v2005 = vmul.f32 %v1957, %v1981
        %v2006 = vmul.f32 %v1958, %v1981
        %v2007 = vmul.f32 %v1959, %v1985
        %v2008 = vmul.f32 %v1960, %v1985
        %v2009 = vmul.f32 %v1961, %v1989
        %v2010 = vmul.f32 %v1962, %v1989
        %v2011 = vmul.f32 %v1963, %v1993
        %v2012 = vmul.f32 %v1964, %v1993
        %v2013 = vmul.f32 %v1965, %v1997
        %v2014 = vmul.f32 %v1966, %v1997
        %2015 = vset.pattern.permute.xlu0 11
        %2016 = vperm.xlu0 %2015, %v559
        %v2017 = vpop.permute.xlu0 %2016
        %2019 = vset.pattern.permute.xlu0 11
        %2020 = vperm.xlu0 %2019, %v560
        %v2021 = vpop.permute.xlu0 %2020
        %2023 = vset.pattern.permute.xlu0 11
        %2024 = vperm.xlu0 %2023, %v561
        %v2025 = vpop.permute.xlu0 %2024
        %2027 = vset.pattern.permute.xlu0 11
        %2028 = vperm.xlu0 %2027, %v562
        %v2029 = vpop.permute.xlu0 %2028
        %2031 = vset.pattern.permute.xlu0 11
        %2032 = vperm.xlu0 %2031, %v563
        %v2033 = vpop.permute.xlu0 %2032
        %2035 = vset.pattern.permute.xlu0 11
        %2036 = vperm.xlu0 %2035, %v564
        %v2037 = vpop.permute.xlu0 %2036
        %2039 = vset.pattern.permute.xlu0 11
        %2040 = vperm.xlu0 %2039, %v565
        %v2041 = vpop.permute.xlu0 %2040
        %2043 = vset.pattern.permute.xlu0 11
        %2044 = vperm.xlu0 %2043, %v566
        %v2045 = vpop.permute.xlu0 %2044
        %v2047 = vadd.f32 %v1999, %v2017
        %v2048 = vadd.f32 %v2000, %v2017
        %v2049 = vadd.f32 %v2001, %v2021
        %v2050 = vadd.f32 %v2002, %v2021
        %v2051 = vadd.f32 %v2003, %v2025
        %v2052 = vadd.f32 %v2004, %v2025
        %v2053 = vadd.f32 %v2005, %v2029
        %v2054 = vadd.f32 %v2006, %v2029
        %v2055 = vadd.f32 %v2007, %v2033
        %v2056 = vadd.f32 %v2008, %v2033
        %v2057 = vadd.f32 %v2009, %v2037
        %v2058 = vadd.f32 %v2010, %v2037
        %v2059 = vadd.f32 %v2011, %v2041
        %v2060 = vadd.f32 %v2012, %v2041
        %v2061 = vadd.f32 %v2013, %v2045
        %v2062 = vadd.f32 %v2014, %v2045
        %v2063 = vmax.f32 %v2047, 0.0
        %v2064 = vmax.f32 %v2048, 0.0
        %v2065 = vmax.f32 %v2049, 0.0
        %v2066 = vmax.f32 %v2050, 0.0
        %v2067 = vmax.f32 %v2051, 0.0
        %v2068 = vmax.f32 %v2052, 0.0
        %v2069 = vmax.f32 %v2053, 0.0
        %v2070 = vmax.f32 %v2054, 0.0
        %v2071 = vmax.f32 %v2055, 0.0
        %v2072 = vmax.f32 %v2056, 0.0
        %v2073 = vmax.f32 %v2057, 0.0
        %v2074 = vmax.f32 %v2058, 0.0
        %v2075 = vmax.f32 %v2059, 0.0
        %v2076 = vmax.f32 %v2060, 0.0
        %v2077 = vmax.f32 %v2061, 0.0
        %v2078 = vmax.f32 %v2062, 0.0
        %2079 = vset.pattern.permute.xlu0 12
        %2080 = vperm.xlu0 %2079, %v559
        %v2081 = vpop.permute.xlu0 %2080
        %2083 = vset.pattern.permute.xlu0 12
        %2084 = vperm.xlu0 %2083, %v560
        %v2085 = vpop.permute.xlu0 %2084
        %2087 = vset.pattern.permute.xlu0 12
        %2088 = vperm.xlu0 %2087, %v561
        %v2089 = vpop.permute.xlu0 %2088
        %2091 = vset.pattern.permute.xlu0 12
        %2092 = vperm.xlu0 %2091, %v562
        %v2093 = vpop.permute.xlu0 %2092
        %2095 = vset.pattern.permute.xlu0 12
        %2096 = vperm.xlu0 %2095, %v563
        %v2097 = vpop.permute.xlu0 %2096
        %2099 = vset.pattern.permute.xlu0 12
        %2100 = vperm.xlu0 %2099, %v564
        %v2101 = vpop.permute.xlu0 %2100
        %2103 = vset.pattern.permute.xlu0 12
        %2104 = vperm.xlu0 %2103, %v565
        %v2105 = vpop.permute.xlu0 %2104
        %2107 = vset.pattern.permute.xlu0 12
        %2108 = vperm.xlu0 %2107, %v566
        %v2109 = vpop.permute.xlu0 %2108
        %v2111 = vmul.f32 %v2063, %v2081
        %v2112 = vmul.f32 %v2064, %v2081
        %v2113 = vmul.f32 %v2065, %v2085
        %v2114 = vmul.f32 %v2066, %v2085
        %v2115 = vmul.f32 %v2067, %v2089
        %v2116 = vmul.f32 %v2068, %v2089
        %v2117 = vmul.f32 %v2069, %v2093
        %v2118 = vmul.f32 %v2070, %v2093
        %v2119 = vmul.f32 %v2071, %v2097
        %v2120 = vmul.f32 %v2072, %v2097
        %v2121 = vmul.f32 %v2073, %v2101
        %v2122 = vmul.f32 %v2074, %v2101
        %v2123 = vmul.f32 %v2075, %v2105
        %v2124 = vmul.f32 %v2076, %v2105
        %v2125 = vmul.f32 %v2077, %v2109
        %v2126 = vmul.f32 %v2078, %v2109
        %v2127 = vadd.f32 %v2111, %v2113
        %v2128 = vadd.f32 %v2127, %v2115
        %v2129 = vadd.f32 %v2128, %v2117
        %v2130 = vadd.f32 %v2129, %v2119
        %v2131 = vadd.f32 %v2130, %v2121
        %v2132 = vadd.f32 %v2131, %v2123
        %v2133 = vadd.f32 %v2132, %v2125
        %v2134 = vrot.slane %v2133, 4
        %v2135 = vadd.f32 %v2133, %v2134
        %v2136 = vrot.slane %v2135, 2
        %v2137 = vadd.f32 %v2135, %v2136
        %v2138 = vrot.slane %v2137, 1
        %v2139 = vadd.f32 %v2137, %v2138
        %v2140 = vadd.f32 %v2112, %v2114
        %v2141 = vadd.f32 %v2140, %v2116
        %v2142 = vadd.f32 %v2141, %v2118
        %v2143 = vadd.f32 %v2142, %v2120
        %v2144 = vadd.f32 %v2143, %v2122
        %v2145 = vadd.f32 %v2144, %v2124
        %v2146 = vadd.f32 %v2145, %v2126
        %v2147 = vrot.slane %v2146, 4
        %v2148 = vadd.f32 %v2146, %v2147
        %v2149 = vrot.slane %v2148, 2
        %v2150 = vadd.f32 %v2148, %v2149
        %v2151 = vrot.slane %v2150, 1
        %v2152 = vadd.f32 %v2150, %v2151
        %2153 = vset.pattern.permute.xlu0 13
        %2154 = vperm.xlu0 %2153, %v559
        %v2155 = vpop.permute.xlu0 %2154
        %v2157 = vadd.f32 %v2139, %v2155
        %v2158 = vadd.f32 %v2152, %v2155
        %v2159 = vtanh.pop %v2157
        %v2160 = vtanh.pop %v2158
        %v2163 = vrot.slane %v2160, 7
        %vm2164 = vcmask 1040384
        %v2165 = vsel %vm2164, %v2159, %v2163
        %v2167 = vlaneseq
        %vm2168 = vcmp.ge.s32.totalorder %v2167, 0
        %vm2169 = vcmp.lt.s32.totalorder %v2167, 256
        %vm2170 = vmand %vm2168, %vm2169
        %2171 = vst.msk [vmem:[%s544] sm:$0x3] %vm2170, %v2165
        %s2172 = sand.u32 %s159, 1
        %s2173 = scalar_lea.sflag [#allocation4], %s2172
        %s2174 = sand.u32 %s159, 1
        %s2175 = smul.addr %s2174, 2
        %s2176 = scalar_lea.vmem [#allocation3], %s2175
        // Predicated region
        $region111: #{tpu_custom_call.1} parent=105 // pred_check
          %p2177 = pneg %p169
        $region112: #{tpu_custom_call.1} parent=105 // pred_check_branch
          %2179 = sbr.rel (%p2177) target = $region114
        $region113: #{tpu_custom_call.1} parent=105 // pred_region
          %s2180 = smul.u32 2, %s20
          %s2181 = ssub.s32 3, %s2180
          %p2182 = scmp.lt.s32.totalorder %s2181, 2
          %s2183 = scalar_select %p2182, %s2181, 2
          %s2184 = ssub.s32 2, %s2183
          %s2185 = sshll.u32 %s2184, 4
          %2186 = vsyncadd %s2173, %s2185
          %p2187 = scmp.ne.s32.totalorder 0, %s2183
          %s2188 = scalar_lea.hbm %s6, %s2180
          %s2189 = sshll.u32 %s2183, 4
          %s2190 = sshll.u32 %s2176, 4
          %s2191 = int_to_ptr.vmem [resolvable:$true] %s2190
          %s2192 = sshll.u32 %s2188, 4
          %s2193 = int_to_ptr.hbm [resolvable:$true] %s2192
          %2195 = dma.vmem_to_hbm [thread:$0]  (%p2187), %s2191, %s2189, %s2193, %s2173
        $region114: #{tpu_custom_call.1} parent=105 // pred_fallthru
          _
      $region106: #{tpu_custom_call.1} parent=5 // pred_fallthru
        _
      %p2196 = scmp.le.s32.totalorder 2, %s15
      // Predicated region
      $region115: #{tpu_custom_call.1} parent=5 // pred_check
        %p2197 = pneg %p2196
      $region116: #{tpu_custom_call.1} parent=5 // pred_check_branch
        %2199 = sbr.rel (%p2197) target = $region118
      $region117: #{tpu_custom_call.1} parent=5 // pred_region
        %s2200 = ssub.s32 %s15, 2
        // Predicated region
        $region119: #{tpu_custom_call.1} parent=117 // pred_check
          %p2201 = pneg %p175
        $region120: #{tpu_custom_call.1} parent=117 // pred_check_branch
          %2203 = sbr.rel (%p2201) target = $region122
        $region121: #{tpu_custom_call.1} parent=117 // pred_region
          %s2204 = sand.u32 %s160, 1
          %s2205 = scalar_lea.sflag [#allocation4], %s2204
          %s2206 = sand.u32 %s160, 1
          %s2207 = smul.addr %s2206, 2
          %s2208 = scalar_lea.vmem [#allocation3], %s2207
          %2210 = dma.done %s2205, 32
        $region122: #{tpu_custom_call.1} parent=117 // pred_fallthru
          _
      $region118: #{tpu_custom_call.1} parent=5 // pred_fallthru
        _
    $region6: #{tpu_custom_call.1} parent=1 // loop_footer
      %s19 = sadd.s32 1, %s15
    $region7: #{tpu_custom_call.1} parent=1 // loop_footer_branch
      %14 = sbr.rel target = $region3
    $region8: #{tpu_custom_call.1} parent=1 // loop_exit
      _
    %2211 = vsyncpa [#allocation4], 1
    %s2212 = scalar_lea.sflag [#allocation4], 1
    %2213 = vsyncpa %s2212, 1

</llo_original>
